<compile_context>
chip_gen: v5e
topology: v5e:2x2
jax: 0.10.0
libtpu: 0.0.40
codegen_flags: <defaults>
</compile_context>

<pallas_src>
import functools
import math

import jax
import jax.numpy as jnp
from jax import lax
from jax.experimental import pallas as pl
from jax.experimental.pallas import tpu as pltpu


def _round_up(n, m):
    return ((n + m - 1) // m) * m


def _gelu(h, approximate):
    if approximate:
        # tanh-approx GELU lowers to the EUP (separate VLIW slot) -> frees the VALU.
        return jax.nn.gelu(h, approximate=True)
    # Exact erf GELU: matches PyTorch nn.GELU() default, but is pure VALU work.
    return 0.5 * h * (1.0 + lax.erf(h * (1.0 / math.sqrt(2.0))))


def _pick_h_chunk(H, target=512):
    """Largest multiple of 128 that divides H and is <= target (else H)."""
    if H <= target or H % 128 != 0:
        return H
    for c in range(target, 127, -128):
        if H % c == 0:
            return c
    return H


# --------------------------------------------------------------------------- #
# Kernels                                                                      #
# --------------------------------------------------------------------------- #
def _ffn_kernel_resident(x_ref, w1_ref, b1_ref, w2_ref, b2_ref, o_ref, *,
                         approximate_gelu, h_chunk):
    # x_ref: (tm, D) | w1_ref: (D, H) | b1_ref: (1, H) | w2_ref: (H, D) | b2_ref: (1, D)
    cdt = w1_ref.dtype                      # MXU compute dtype (bf16 by default)
    tm = x_ref.shape[0]
    D = o_ref.shape[1]
    H = w1_ref.shape[1]
    n_chunks = H // h_chunk

    x = x_ref[...].astype(cdt)
    acc = jnp.zeros((tm, D), jnp.float32)
    # Static unrolled chunk loop over the hidden dim: bounds the f32 intermediate
    # to (tm, h_chunk) and lets the scheduler overlap MXU (next chunk's matmul)
    # with EUP/VPU (this chunk's GELU).
    for c in range(n_chunks):
        lo = c * h_chunk
        hi = lo + h_chunk
        h = jnp.dot(x, w1_ref[:, lo:hi], preferred_element_type=jnp.float32)
        h = h + b1_ref[:, lo:hi]
        h = _gelu(h, approximate_gelu)
        acc = acc + jnp.dot(h.astype(cdt), w2_ref[lo:hi, :],
                            preferred_element_type=jnp.float32)
    # Dropout(p=0.0) is the identity.
    # TODO(synk): stochastic dropout via pltpu.prng_* if p > 0 is ever needed.
    o_ref[...] = (acc + b2_ref[...]).astype(o_ref.dtype)


def _ffn_kernel_streamed(x_ref, w1_ref, b1_ref, w2_ref, b2_ref, o_ref, acc_ref, *,
                         approximate_gelu):
    # Fallback for weights too large to keep resident: grid = (tokens, H chunks),
    # accumulate the second matmul into a (tm, D) f32 scratch.
    k = pl.program_id(1)

    @pl.when(k == 0)
    def _():
        acc_ref[...] = jnp.zeros_like(acc_ref)

    cdt = w1_ref.dtype
    x = x_ref[...].astype(cdt)
    h = jnp.dot(x, w1_ref[...], preferred_element_type=jnp.float32) + b1_ref[...]
    h = _gelu(h, approximate_gelu)
    acc_ref[...] += jnp.dot(h.astype(cdt), w2_ref[...],
                            preferred_element_type=jnp.float32)

    @pl.when(k == pl.num_programs(1) - 1)
    def _():
        o_ref[...] = (acc_ref[...] + b2_ref[...]).astype(o_ref.dtype)


# --------------------------------------------------------------------------- #
# Feature / hardware probes                                                    #
# --------------------------------------------------------------------------- #
def _probe_copy_kernel(x_ref, o_ref):
    o_ref[...] = x_ref[...]


@functools.lru_cache(maxsize=None)
def _single_buffered_weights_supported():
    """One-time probe: does this build accept pipeline_mode=pl.Buffered(1)?

    Probing a trivial kernel (constant-index input, grid of 2) keeps the real
    kernel's errors visible and makes the buffering mode — and the VMEM math that
    depends on it — deterministic, instead of a best-effort bare try/except
    around the real pallas_call.
    """
    if not hasattr(pl, "Buffered"):
        return False
    try:
        f = pl.pallas_call(
            _probe_copy_kernel,
            out_shape=jax.ShapeDtypeStruct((16, 128), jnp.float32),
            grid=(2,),
            in_specs=[pl.BlockSpec((8, 128), lambda i: (0, 0),
                                   pipeline_mode=pl.Buffered(buffer_count=1))],
            out_specs=pl.BlockSpec((8, 128), lambda i: (i, 0)),
        )
        jax.block_until_ready(f(jnp.zeros((8, 128), jnp.float32)))
        return True
    except Exception:  # scoped to the feature probe only; safe to disable on failure
        return False


@functools.lru_cache(maxsize=None)
def _vmem_capacity_bytes():
    try:
        return int(pltpu.get_tpu_info().vmem_capacity_bytes)
    except Exception:
        return 64 << 20  # conservative: v7x per-TensorCore VMEM


# --------------------------------------------------------------------------- #
# Wrapper                                                                      #
# --------------------------------------------------------------------------- #
def feed_forward(x, w1, b1, w2, b2, *, tm=None, compute_dtype=jnp.bfloat16,
                 approximate_gelu=True, h_chunk_target=512):
    """ViT FeedForward.  x: (B, S, D).  w1: (D, H), b1: (H,), w2: (H, D), b2: (D,).

    approximate_gelu=True (default) uses the tanh GELU: the bf16 weight cast
    already dominates the error vs. a pure-f32 erf reference, and tanh keeps the
    kernel off the VALU.  Pass approximate_gelu=False and compute_dtype=float32
    for closest-to-PyTorch numerics.
    """
    B, S, D = x.shape
    H = w1.shape[1]
    M = B * S

    vmem_cap = _vmem_capacity_bytes()
    usable_vmem = max(vmem_cap - (8 << 20), 32 << 20)   # headroom for compiler scratch
    single_buf = _single_buffered_weights_supported()

    itemsize_c = jnp.dtype(compute_dtype).itemsize
    itemsize_x = jnp.dtype(x.dtype).itemsize

    # --- Token tile -----------------------------------------------------------
    if tm is None:
        # Bigger tiles on 128-MiB-VMEM parts (v5e/v6e); 256 on v7x's 64 MiB.
        tm = 512 if vmem_cap >= (96 << 20) else 256
    tm_eff = min(tm, _round_up(M, 8))
    # v7x megacore: keep >= 2 iterations on the "parallel" token axis so both
    # TensorCores get work.
    if _round_up(M, tm_eff) // tm_eff < 2 and M > 16:
        tm_eff = _round_up(-(-M // 2), 8)
    M_pad = _round_up(M, tm_eff)
    grid_m = M_pad // tm_eff

    x2 = x.reshape(M, D)
    if M_pad != M:
        x2 = jnp.pad(x2, ((0, M_pad - M), (0, 0)))      # padded rows sliced off below

    # bf16 weights (native MXU rate, half the DMA bytes); biases/accum stay f32.
    # Activations keep the caller's dtype (no wrapper-side cast).
    # TODO(synk): optional fp8 weight path on v7x (2x MXU rate, half the footprint).
    w1c = w1.astype(compute_dtype)
    w2c = w2.astype(compute_dtype)
    b1_2 = b1.reshape(1, H).astype(jnp.float32)
    b2_2 = b2.reshape(1, D).astype(jnp.float32)

    wbuf = 1 if single_buf else 2
    h_chunk = _pick_h_chunk(H, h_chunk_target)

    cost = pl.CostEstimate(
        flops=4 * M_pad * D * H,                 # two matmuls
        transcendentals=M_pad * H,               # GELU
        bytes_accessed=(2 * M_pad * D * itemsize_x
                        + 2 * D * H * itemsize_c + (H + D) * 4),
    )

    # Working set if weights stay resident in VMEM for the whole grid.
    resident_ws = (wbuf * (2 * D * H * itemsize_c + (H + D) * 4)   # weights + biases
                   + 4 * tm_eff * D * itemsize_x                   # x/out tiles, double-buffered
                   + tm_eff * h_chunk * 4 + tm_eff * D * 4)        # f32 chunk + accumulator
    use_resident = resident_ws <= usable_vmem

    weight_kwargs = ({"pipeline_mode": pl.Buffered(buffer_count=1)} if single_buf else {})

    if use_resident:
        vmem_limit = int(min(max(resident_ws + (16 << 20), 32 << 20), usable_vmem))
        kernel = functools.partial(_ffn_kernel_resident,
                                   approximate_gelu=approximate_gelu,
                                   h_chunk=h_chunk)
        const1 = lambda i: (0, 0)
        out = pl.pallas_call(
            kernel,
            out_shape=jax.ShapeDtypeStruct((M_pad, D), x.dtype),
            grid_spec=pltpu.PrefetchScalarGridSpec(
                num_scalar_prefetch=0,
                grid=(grid_m,),
                in_specs=[
                    pl.BlockSpec((tm_eff, D), lambda i: (i, 0)),        # x tile (rows)
                    pl.BlockSpec((D, H), const1, **weight_kwargs),      # w1 (resident)
                    pl.BlockSpec((1, H), const1, **weight_kwargs),      # b1
                    pl.BlockSpec((H, D), const1, **weight_kwargs),      # w2 (resident)
                    pl.BlockSpec((1, D), const1, **weight_kwargs),      # b2
                ],
                out_specs=pl.BlockSpec((tm_eff, D), lambda i: (i, 0)),
            ),
            compiler_params=pltpu.CompilerParams(
                dimension_semantics=("parallel",),
                vmem_limit_bytes=vmem_limit,
            ),
            cost_estimate=cost,
        )(x2, w1c, b1_2, w2c, b2_2)
    else:
        # Weights too large for resident VMEM: stream H chunks over an
        # "arbitrary" grid axis with an accumulator scratch.
        th = min(512, _round_up(H, 128))
        H_pad = _round_up(H, th)
        if H_pad != H:
            # Zero-padded hidden units: gelu(0)=0 and padded w2 rows are zero,
            # so they contribute nothing.
            w1c = jnp.pad(w1c, ((0, 0), (0, H_pad - H)))
            b1_2 = jnp.pad(b1_2, ((0, 0), (0, H_pad - H)))
            w2c = jnp.pad(w2c, ((0, H_pad - H), (0, 0)))
        grid_h = H_pad // th

        streamed_ws = (2 * 2 * D * th * itemsize_c + 2 * (th + D) * 4
                       + 4 * tm_eff * D * itemsize_x
                       + tm_eff * th * 4 + tm_eff * D * 4)
        vmem_limit = int(min(max(streamed_ws + (16 << 20), 32 << 20), usable_vmem))
        kernel = functools.partial(_ffn_kernel_streamed,
                                   approximate_gelu=approximate_gelu)
        out = pl.pallas_call(
            kernel,
            out_shape=jax.ShapeDtypeStruct((M_pad, D), x.dtype),
            grid_spec=pltpu.PrefetchScalarGridSpec(
                num_scalar_prefetch=0,
                grid=(grid_m, grid_h),
                in_specs=[
                    pl.BlockSpec((tm_eff, D), lambda i, k: (i, 0)),     # x tile
                    pl.BlockSpec((D, th), lambda i, k: (0, k)),         # w1 chunk
                    pl.BlockSpec((1, th), lambda i, k: (0, k)),         # b1 chunk
                    pl.BlockSpec((th, D), lambda i, k: (k, 0)),         # w2 chunk
                    pl.BlockSpec((1, D), lambda i, k: (0, 0)),          # b2
                ],
                out_specs=pl.BlockSpec((tm_eff, D), lambda i, k: (i, 0)),
                scratch_shapes=[pltpu.VMEM((tm_eff, D), jnp.float32)],
            ),
            compiler_params=pltpu.CompilerParams(
                dimension_semantics=("parallel", "arbitrary"),
                vmem_limit_bytes=vmem_limit,
            ),
            cost_estimate=cost,
        )(x2, w1c, b1_2, w2c, b2_2)

    return out[:M].reshape(B, S, D)


# --------------------------------------------------------------------------- #
# Reference + self-test                                                        #
# --------------------------------------------------------------------------- #
def _reference(x2, w1, b1, w2, b2, approximate_gelu):
    h = x2 @ w1 + b1
    h = _gelu(h, approximate_gelu)
    return h @ w2 + b2


if __name__ == "__main__":
    # Small but TPU-realistic shapes: B*S = 2*197 tokens (not a multiple of the
    # row tile -> exercises the cdiv/padding + megacore-split path), lane-aligned
    # feature dims.
    B, S, D, HID = 2, 197, 128, 256

    key = jax.random.PRNGKey(0)
    kx, k1, k2, k3, k4 = jax.random.split(key, 5)

    x = jax.random.normal(kx, (B, S, D), dtype=jnp.float32)

    # Deterministic parameter init (Linear(dim, hidden), Linear(hidden, dim)).
    bound1 = 1.0 / math.sqrt(D)
    bound2 = 1.0 / math.sqrt(HID)
    w1 = jax.random.uniform(k1, (D, HID), minval=-bound1, maxval=bound1, dtype=jnp.float32)
    b1 = jax.random.uniform(k2, (HID,), minval=-bound1, maxval=bound1, dtype=jnp.float32)
    w2 = jax.random.uniform(k3, (HID, D), minval=-bound2, maxval=bound2, dtype=jnp.float32)
    b2 = jax.random.uniform(k4, (D,), minval=-bound2, maxval=bound2, dtype=jnp.float32)

    y = feed_forward(x, w1, b1, w2, b2)
    y = jax.block_until_ready(y)

    # f32 reference with the same (tanh) GELU flavor -> the remaining error is
    # the bf16 weight cast inside the MXU matmuls (hence the 3e-2 tolerance).
    y_ref = _reference(x.reshape(B * S, D), w1, b1, w2, b2,
                       approximate_gelu=True).reshape(B, S, D)
    assert y.shape == (B, S, D)
    assert jnp.allclose(y, y_ref, atol=3e-2, rtol=3e-2), "Pallas FFN mismatch vs reference"

    print("KERNEL_OK")
</pallas_src>

<mosaic_0001>
module attributes {stable_mosaic.version = 11 : i64} {
  func.func @_probe_copy_kernel(%arg0: i32, %arg1: memref<8x128xf32, #tpu.memory_space<vmem>>, %arg2: memref<8x128xf32, #tpu.memory_space<vmem>>) attributes {dimension_semantics = [#tpu.dimension_semantics<arbitrary>], iteration_bounds = array<i64: 2>, scalar_prefetch = 0 : i64, scratch_operands = 0 : i64, tpu.core_type = #tpu.core_type<tc>, window_params = [{pipeline_mode = #tpu.pipeline_mode<synchronous>, transform_indices = @transform_0, window_bounds = array<i64: 8, 128>}, {transform_indices = @transform_1, window_bounds = array<i64: 8, 128>}]} {
    %c0 = arith.constant 0 : index
    %c0_0 = arith.constant 0 : index
    %0 = vector.load %arg1[%c0, %c0_0] : memref<8x128xf32, #tpu.memory_space<vmem>>, vector<8x128xf32>
    %c0_1 = arith.constant 0 : index
    %c0_2 = arith.constant 0 : index
    %1 = vector.load %arg2[%c0_1, %c0_2] : memref<8x128xf32, #tpu.memory_space<vmem>>, vector<8x128xf32>
    tpu.vector_store %arg2[%c0_1, %c0_2], %0 {strides = array<i32>} : memref<8x128xf32, #tpu.memory_space<vmem>>, vector<8x128xf32>,
    return
  }
  func.func @transform_0(%arg0: i32) -> (i32, i32) {
    %c0_i32 = arith.constant 0 : i32
    %c0_i32_0 = arith.constant 0 : i32
    %c0_i32_1 = arith.constant 0 : i32
    return %c0_i32, %c0_i32_0 : i32, i32
  }
  func.func @transform_1(%arg0: i32) -> (i32, i32) {
    %c0_i32 = arith.constant 0 : i32
    %c0_i32_0 = arith.constant 0 : i32
    return %arg0, %c0_i32 : i32, i32
  }
}

module attributes {stable_mosaic.version = 11 : i64} {
  func.func @_ffn_kernel_resident(%arg0: i32, %arg1: memref<256x128xf32, #tpu.memory_space<vmem>>, %arg2: memref<128x256xbf16, #tpu.memory_space<vmem>>, %arg3: memref<1x256xf32, #tpu.memory_space<vmem>>, %arg4: memref<256x128xbf16, #tpu.memory_space<vmem>>, %arg5: memref<1x128xf32, #tpu.memory_space<vmem>>, %arg6: memref<256x128xf32, #tpu.memory_space<vmem>>) attributes {dimension_semantics = [#tpu.dimension_semantics<parallel>], iteration_bounds = array<i64: 2>, scalar_prefetch = 0 : i64, scratch_operands = 0 : i64, tpu.core_type = #tpu.core_type<tc>, window_params = [{transform_indices = @transform_0, window_bounds = array<i64: 256, 128>}, {pipeline_mode = #tpu.pipeline_mode<synchronous>, transform_indices = @transform_1, window_bounds = array<i64: 128, 256>}, {pipeline_mode = #tpu.pipeline_mode<synchronous>, transform_indices = @transform_2, window_bounds = array<i64: 1, 256>}, {pipeline_mode = #tpu.pipeline_mode<synchronous>, transform_indices = @transform_3, window_bounds = array<i64: 256, 128>}, {pipeline_mode = #tpu.pipeline_mode<synchronous>, transform_indices = @transform_4, window_bounds = array<i64: 1, 128>}, {transform_indices = @transform_5, window_bounds = array<i64: 256, 128>}]} {
    %c0 = arith.constant 0 : index
    %c0_0 = arith.constant 0 : index
    %0 = vector.load %arg1[%c0, %c0_0] : memref<256x128xf32, #tpu.memory_space<vmem>>, vector<256x128xf32>
    %1 = arith.truncf %0 : vector<256x128xf32> to vector<256x128xbf16>
    %cst = arith.constant 0.000000e+00 : f32
    %2 = vector.broadcast %cst : f32 to vector<256x128xf32>
    %c0_1 = arith.constant 0 : index
    %c0_2 = arith.constant 0 : index
    %3 = vector.load %arg2[%c0_1, %c0_2] : memref<128x256xbf16, #tpu.memory_space<vmem>>, vector<128x256xbf16>
    %cst_3 = arith.constant dense<0.000000e+00> : vector<256x256xf32>
    %4 = tpu.matmul %1, %3, %cst_3 {dimension_numbers = #tpu.dot_dimension_numbers<[1], [0], [0], [1], [0, 0, 1, 1], [], []>} : vector<256x128xbf16>, vector<128x256xbf16>, vector<256x256xf32> -> vector<256x256xf32>
    %c0_4 = arith.constant 0 : index
    %c0_5 = arith.constant 0 : index
    %5 = vector.load %arg3[%c0_4, %c0_5] : memref<1x256xf32, #tpu.memory_space<vmem>>, vector<1x256xf32>
    %6 = vector.broadcast %5 : vector<1x256xf32> to vector<256x256xf32>
    %7 = arith.addf %4, %6 : vector<256x256xf32>
    %8 = arith.mulf %7, %7 : vector<256x256xf32>
    %9 = arith.mulf %7, %8 : vector<256x256xf32>
    %cst_6 = arith.constant 4.471500e-02 : f32
    %10 = vector.broadcast %cst_6 : f32 to vector<256x256xf32>
    %11 = arith.mulf %10, %9 : vector<256x256xf32>
    %12 = arith.addf %7, %11 : vector<256x256xf32>
    %cst_7 = arith.constant 0.797884583 : f32
    %13 = vector.broadcast %cst_7 : f32 to vector<256x256xf32>
    %14 = arith.mulf %13, %12 : vector<256x256xf32>
    %15 = math.tanh %14 : vector<256x256xf32>
    %cst_8 = arith.constant 1.000000e+00 : f32
    %16 = vector.broadcast %cst_8 : f32 to vector<256x256xf32>
    %17 = arith.addf %16, %15 : vector<256x256xf32>
    %cst_9 = arith.constant 5.000000e-01 : f32
    %18 = vector.broadcast %cst_9 : f32 to vector<256x256xf32>
    %19 = arith.mulf %18, %17 : vector<256x256xf32>
    %20 = arith.mulf %7, %19 : vector<256x256xf32>
    %21 = arith.truncf %20 : vector<256x256xf32> to vector<256x256xbf16>
    %c0_10 = arith.constant 0 : index
    %c0_11 = arith.constant 0 : index
    %22 = vector.load %arg4[%c0_10, %c0_11] : memref<256x128xbf16, #tpu.memory_space<vmem>>, vector<256x128xbf16>
    %cst_12 = arith.constant dense<0.000000e+00> : vector<256x128xf32>
    %23 = tpu.matmul %21, %22, %cst_12 {dimension_numbers = #tpu.dot_dimension_numbers<[1], [0], [0], [1], [0, 0, 1, 1], [], []>} : vector<256x256xbf16>, vector<256x128xbf16>, vector<256x128xf32> -> vector<256x128xf32>
    %24 = arith.addf %2, %23 : vector<256x128xf32>
    %c0_13 = arith.constant 0 : index
    %c0_14 = arith.constant 0 : index
    %25 = vector.load %arg5[%c0_13, %c0_14] : memref<1x128xf32, #tpu.memory_space<vmem>>, vector<1x128xf32>
    %26 = vector.broadcast %25 : vector<1x128xf32> to vector<256x128xf32>
    %27 = arith.addf %24, %26 : vector<256x128xf32>
    %c0_15 = arith.constant 0 : index
    %c0_16 = arith.constant 0 : index
    %28 = vector.load %arg6[%c0_15, %c0_16] : memref<256x128xf32, #tpu.memory_space<vmem>>, vector<256x128xf32>
    tpu.vector_store %arg6[%c0_15, %c0_16], %27 {strides = array<i32>} : memref<256x128xf32, #tpu.memory_space<vmem>>, vector<256x128xf32>,
    return
  }
  func.func @transform_0(%arg0: i32) -> (i32, i32) {
    %c0_i32 = arith.constant 0 : i32
    %c0_i32_0 = arith.constant 0 : i32
    return %arg0, %c0_i32 : i32, i32
  }
  func.func @transform_1(%arg0: i32) -> (i32, i32) {
    %c0_i32 = arith.constant 0 : i32
    %c0_i32_0 = arith.constant 0 : i32
    %c0_i32_1 = arith.constant 0 : i32
    return %c0_i32, %c0_i32_0 : i32, i32
  }
  func.func @transform_2(%arg0: i32) -> (i32, i32) {
    %c0_i32 = arith.constant 0 : i32
    %c0_i32_0 = arith.constant 0 : i32
    %c0_i32_1 = arith.constant 0 : i32
    return %c0_i32, %c0_i32_0 : i32, i32
  }
  func.func @transform_3(%arg0: i32) -> (i32, i32) {
    %c0_i32 = arith.constant 0 : i32
    %c0_i32_0 = arith.constant 0 : i32
    %c0_i32_1 = arith.constant 0 : i32
    return %c0_i32, %c0_i32_0 : i32, i32
  }
  func.func @transform_4(%arg0: i32) -> (i32, i32) {
    %c0_i32 = arith.constant 0 : i32
    %c0_i32_0 = arith.constant 0 : i32
    %c0_i32_1 = arith.constant 0 : i32
    return %c0_i32, %c0_i32_0 : i32, i32
  }
  func.func @transform_5(%arg0: i32) -> (i32, i32) {
    %c0_i32 = arith.constant 0 : i32
    %c0_i32_0 = arith.constant 0 : i32
    return %arg0, %c0_i32 : i32, i32
  }
}

</mosaic_0001>

<llo_original>
// kernel: tpu_custom_call.1
$region0: #{tpu_custom_call.1}
  #allocation0 [shape = 'u32[]', space=smem, size = 0x4, offset = 0x4, fixed_abs, tag = 'smem constant byte address 0x4 - core index']
  #allocation1 [shape = 'u32[72,128]{1,0:T(1,128)}', space=vmem, size = 0x9000, scoped, tag = 'internal scratch']
  %s0 = inlined_call_operand.hbm [shape: f32[8,128], index: 0, kind: input, shape index: {}]
  %s1 = inlined_call_operand.hbm [shape: f32[16,128], index: 1, kind: output, shape index: {}]
  %s2 = sld [smem:[#allocation0]]
  $region41: #{tpu_custom_call.1} parent=0
    _
  %s4 = ssub.s32 1, %s2
  %s5 = scalar_select 0, %s4, %s2
  $region1: #{tpu_custom_call.1} parent=0
    #allocation2 [shape = 'u8[4096]{0}', space=vmem, size = 0x1000, scoped, tag = 'input window, operand 0, single buffered']
    #allocation3 [shape = 's32[2]{0}', space=sflag, size = 0x8, scoped, tag = 'scoped memory for tpu_custom_call.1']
    #allocation4 [shape = 's32[2]{0}', space=sflag, size = 0x8, scoped, tag = 'scoped memory for tpu_custom_call.1']
    #allocation5 [shape = 'u8[8192]{0}', space=vmem, size = 0x2000, scoped, tag = 'output window, operand 0']
    %6 = vsyncpa [#allocation3], 0
    %7 = vsyncpa [#allocation4], 0
    %s8 = scalar_lea.sflag [#allocation4], 1
    %9 = vsyncpa %s8, 0
    loop: start=0, step=1, limit=4
    $region2: #{tpu_custom_call.1} parent=1 // loop_pre_header
      _
    $region3: #{tpu_custom_call.1} parent=1 // loop_header
      %s11 = sphi 0, %s15
      %p12 = scmp.ge.s32.totalorder %s11, 4
      %s19 = sphi 0, %s19
      %s21 = sphi 0, %s19
      %s22 = sphi 0, %s21
      %s36 = sphi 0, %s22
      %s42 = sphi 0, %s44
      %s45 = sphi 0, %s42
      %s46 = sphi 0, %s45
      %s62 = sphi 0, %s46
    $region4: #{tpu_custom_call.1} parent=1 // loop_header_branch
      %14 = sbr.rel (%p12) target = $region8
    $region5: #{tpu_custom_call.1} parent=1 // loop_body
      %s16 = ssub.s32 %s11, 1
      %s17 = ssub.s32 %s11, 2
      %s18 = sadd.s32 %s11, 1
      %s20 = sadd.s32 %s19, 1
      %p23 = scmp.eq.s32.totalorder %s11, 1
      %p24 = scmp.ne.s32.totalorder %s19, %s21
      %p25 = scmp.eq.s32.totalorder %s11, 0
      %p26 = por %p24, %p25
      %p27 = scmp.ne.s32.totalorder %s19, %s21
      %p28 = scmp.eq.s32.totalorder %s16, 1
      %p29 = por %p27, %p28
      %p30 = scmp.ne.s32.totalorder %s21, %s22
      %p31 = scmp.eq.s32.totalorder %s16, 0
      %p32 = por %p30, %p31
      %p33 = scmp.ne.s32.totalorder %s21, %s22
      %p34 = scmp.eq.s32.totalorder %s17, 1
      %p35 = por %p33, %p34
      %p37 = scmp.ne.s32.totalorder %s22, %s36
      %p38 = scmp.eq.s32.totalorder %s17, 0
      %p39 = por %p37, %p38
      %s40 = ssub.s32 %s11, %s18
      %p41 = scmp.eq.s32.totalorder %s40, 0
      %s43 = sadd.s32 %s42, 1
      %s44 = scalar_select %p41, %s42, %s43
      %p47 = pneg %p41
      %p48 = scmp.eq.s32.totalorder %s11, 1
      %p49 = por %p47, %p48
      %p50 = scmp.ne.s32.totalorder %s42, %s45
      %p51 = scmp.eq.s32.totalorder %s11, 0
      %p52 = por %p50, %p51
      %p53 = scmp.ne.s32.totalorder %s42, %s45
      %p54 = scmp.eq.s32.totalorder %s16, 1
      %p55 = por %p53, %p54
      %p56 = scmp.ne.s32.totalorder %s45, %s46
      %p57 = scmp.eq.s32.totalorder %s16, 0
      %p58 = por %p56, %p57
      %p59 = scmp.ne.s32.totalorder %s45, %s46
      %p60 = scmp.eq.s32.totalorder %s17, 1
      %p61 = por %p59, %p60
      %p63 = scmp.ne.s32.totalorder %s46, %s62
      %p64 = scmp.eq.s32.totalorder %s17, 0
      %p65 = por %p63, %p64
      %p66 = scmp.le.s32.totalorder 1, %s11
      %p67 = scmp.lt.s32.totalorder %s11, 3
      %p68 = pnand %p66, %p67
      %p69 = pneg %p68
      // Predicated region
      $region9: #{tpu_custom_call.1} parent=5 // pred_check
        _
      $region10: #{tpu_custom_call.1} parent=5 // pred_check_branch
        %71 = sbr.rel (%p68) target = $region12
      $region11: #{tpu_custom_call.1} parent=5 // pred_region
        %s72 = ssub.s32 %s11, 1
        // Predicated region
        $region13: #{tpu_custom_call.1} parent=11 // pred_check
          %p73 = pneg %p32
        $region14: #{tpu_custom_call.1} parent=11 // pred_check_branch
          %75 = sbr.rel (%p73) target = $region16
        $region15: #{tpu_custom_call.1} parent=11 // pred_region
          %77 = vsyncadd [#allocation3], 0
          %s79 = sshll.u32 %s0, 4
          %s80 = int_to_ptr.hbm [resolvable:$true] %s79
          %s81 = sshll.u32 [#allocation2], 4
          %s82 = int_to_ptr.vmem [resolvable:$true] %s81
          %84 = dma.hbm_to_vmem [thread:$0]  %s80, 128, %s82, [#allocation3]
        $region16: #{tpu_custom_call.1} parent=11 // pred_fallthru
          _
      $region12: #{tpu_custom_call.1} parent=5 // pred_fallthru
        _
      %p85 = scmp.lt.s32.totalorder %s11, 2
      // Predicated region
      $region17: #{tpu_custom_call.1} parent=5 // pred_check
        %p86 = pneg %p85
      $region18: #{tpu_custom_call.1} parent=5 // pred_check_branch
        %88 = sbr.rel (%p86) target = $region20
      $region19: #{tpu_custom_call.1} parent=5 // pred_region
        _
      $region20: #{tpu_custom_call.1} parent=5 // pred_fallthru
        _
      %p89 = scmp.le.s32.totalorder 1, %s11
      %p90 = scmp.lt.s32.totalorder %s11, 3
      %p91 = pnand %p89, %p90
      %p92 = pneg %p91
      // Predicated region
      $region21: #{tpu_custom_call.1} parent=5 // pred_check
        _
      $region22: #{tpu_custom_call.1} parent=5 // pred_check_branch
        %94 = sbr.rel (%p91) target = $region24
      $region23: #{tpu_custom_call.1} parent=5 // pred_region
        %s95 = ssub.s32 %s11, 1
        // Predicated region
        $region25: #{tpu_custom_call.1} parent=23 // pred_check
          %p96 = pneg %p32
        $region26: #{tpu_custom_call.1} parent=23 // pred_check_branch
          %98 = sbr.rel (%p96) target = $region28
        $region27: #{tpu_custom_call.1} parent=23 // pred_region
          %100 = dma.done [#allocation3], 128
        $region28: #{tpu_custom_call.1} parent=23 // pred_fallthru
          _
        %p101 = pneg %p32
        %p102 = pneg %p29
        %p103 = pneg %p58
        %p104 = pneg %p55
        %s105 = sand.u32 %s45, 1
        %s106 = scalar_lea.sflag [#allocation4], %s105
        %s107 = sand.u32 %s45, 1
        %s108 = smul.addr %s107, 8
        %s109 = scalar_lea.vmem [#allocation5], %s108
        %v110 = vld [vmem:[#allocation2] sm:$0xff]
        %111 = vst [vmem:[%s109] sm:$0xff] %v110
        %s112 = sand.u32 %s45, 1
        %s113 = scalar_lea.sflag [#allocation4], %s112
        %s114 = sand.u32 %s45, 1
        %s115 = smul.addr %s114, 8
        %s116 = scalar_lea.vmem [#allocation5], %s115
        // Predicated region
        $region29: #{tpu_custom_call.1} parent=23 // pred_check
          %p117 = pneg %p55
        $region30: #{tpu_custom_call.1} parent=23 // pred_check_branch
          %119 = sbr.rel (%p117) target = $region32
        $region31: #{tpu_custom_call.1} parent=23 // pred_region
          %121 = vsyncadd %s113, 0
          %s122 = smul.addr %s16, 8
          %s123 = scalar_lea.hbm %s1, %s122
          %s125 = sshll.u32 %s116, 4
          %s126 = int_to_ptr.vmem [resolvable:$true] %s125
          %s127 = sshll.u32 %s123, 4
          %s128 = int_to_ptr.hbm [resolvable:$true] %s127
          %130 = dma.vmem_to_hbm [thread:$0]  %s126, 128, %s128, %s113
        $region32: #{tpu_custom_call.1} parent=23 // pred_fallthru
          _
      $region24: #{tpu_custom_call.1} parent=5 // pred_fallthru
        _
      %p131 = scmp.le.s32.totalorder 2, %s11
      // Predicated region
      $region33: #{tpu_custom_call.1} parent=5 // pred_check
        %p132 = pneg %p131
      $region34: #{tpu_custom_call.1} parent=5 // pred_check_branch
        %134 = sbr.rel (%p132) target = $region36
      $region35: #{tpu_custom_call.1} parent=5 // pred_region
        %s135 = ssub.s32 %s11, 2
        // Predicated region
        $region37: #{tpu_custom_call.1} parent=35 // pred_check
          %p136 = pneg %p61
        $region38: #{tpu_custom_call.1} parent=35 // pred_check_branch
          %138 = sbr.rel (%p136) target = $region40
        $region39: #{tpu_custom_call.1} parent=35 // pred_region
          %s139 = sand.u32 %s46, 1
          %s140 = scalar_lea.sflag [#allocation4], %s139
          %s141 = sand.u32 %s46, 1
          %s142 = smul.addr %s141, 8
          %s143 = scalar_lea.vmem [#allocation5], %s142
          %145 = dma.done %s140, 128
        $region40: #{tpu_custom_call.1} parent=35 // pred_fallthru
          _
      $region36: #{tpu_custom_call.1} parent=5 // pred_fallthru
        _
    $region6: #{tpu_custom_call.1} parent=1 // loop_footer
      %s15 = sadd.s32 1, %s11
    $region7: #{tpu_custom_call.1} parent=1 // loop_footer_branch
      %10 = sbr.rel target = $region3
    $region8: #{tpu_custom_call.1} parent=1 // loop_exit
      _
    %146 = vsyncpa [#allocation3], 1
    %s147 = scalar_lea.sflag [#allocation3], 1
    %148 = vsyncpa %s147, 1
    %149 = vsyncpa [#allocation4], 1
    %s150 = scalar_lea.sflag [#allocation4], 1
    %151 = vsyncpa %s150, 1

// kernel: tpu_custom_call.1
$region0: #{tpu_custom_call.1}
  #allocation0 [shape = 'u32[]', space=smem, size = 0x4, offset = 0x4, fixed_abs, tag = 'smem constant byte address 0x4 - core index']
  #allocation1 [shape = 'u32[72,128]{1,0:T(1,128)}', space=vmem, size = 0x9000, scoped, tag = 'internal scratch']
  %s0 = inlined_call_operand.hbm [shape: f32[512,128], index: 0, kind: input, shape index: {}]
  %s1 = inlined_call_operand.hbm [shape: bf16[128,256], index: 1, kind: input, shape index: {}]
  %s2 = inlined_call_operand.hbm [shape: f32[1,256], index: 2, kind: input, shape index: {}]
  %s3 = inlined_call_operand.hbm [shape: bf16[256,128], index: 3, kind: input, shape index: {}]
  %s4 = inlined_call_operand.vmem [shape: f32[1,128], index: 4, kind: input, shape index: {}]
  %s5 = inlined_call_operand.hbm [shape: f32[512,128], index: 5, kind: output, shape index: {}]
  %s6 = sld [smem:[#allocation0]]
  $region69: #{tpu_custom_call.1} parent=0
    _
  %s8 = ssub.s32 1, %s6
  %s9 = scalar_select 0, %s8, %s6
  $region1: #{tpu_custom_call.1} parent=0
    #allocation2 [shape = 'u8[262144]{0}', space=vmem, size = 0x40000, scoped, tag = 'input window, operand 0']
    #allocation3 [shape = 's32[2]{0}', space=sflag, size = 0x8, scoped, tag = 'scoped memory for tpu_custom_call.1']
    #allocation4 [shape = 's32[2]{0}', space=sflag, size = 0x8, scoped, tag = 'scoped memory for tpu_custom_call.1']
    #allocation5 [shape = 'u8[65536]{0}', space=vmem, size = 0x10000, scoped, tag = 'input window, operand 1, single buffered']
    #allocation6 [shape = 's32[1]{0}', space=sflag, size = 0x4, scoped, tag = 'scoped memory for tpu_custom_call.1']
    #allocation7 [shape = 'u8[1024]{0}', space=vmem, size = 0x400, scoped, tag = 'input window, operand 2, single buffered']
    #allocation8 [shape = 'u8[65536]{0}', space=vmem, size = 0x10000, scoped, tag = 'input window, operand 3, single buffered']
    #allocation9 [shape = 's32[1]{0}', space=sflag, size = 0x4, scoped, tag = 'scoped memory for tpu_custom_call.1']
    #allocation10 [shape = 'u8[262144]{0}', space=vmem, size = 0x40000, scoped, tag = 'output window, operand 0']
    %10 = vsyncpa [#allocation3], 0
    %s11 = scalar_lea.sflag [#allocation3], 1
    %12 = vsyncpa %s11, 0
    %13 = vsyncpa [#allocation6], 0
    %14 = vsyncpa [#allocation9], 0
    %15 = vsyncpa [#allocation4], 0
    %s16 = scalar_lea.sflag [#allocation4], 1
    %17 = vsyncpa %s16, 0
    loop: start=0, step=1, limit=4
    $region2: #{tpu_custom_call.1} parent=1 // loop_pre_header
      _
    $region3: #{tpu_custom_call.1} parent=1 // loop_header
      %s19 = sphi 0, %s23
      %p20 = scmp.ge.s32.totalorder %s19, 4
      %s29 = sphi 0, %s31
      %s32 = sphi 0, %s29
      %s33 = sphi 0, %s32
      %s49 = sphi 0, %s33
      %s53 = sphi 0, %s53
      %s55 = sphi 0, %s53
      %s56 = sphi 0, %s55
      %s70 = sphi 0, %s56
      %s74 = sphi 0, %s74
      %s76 = sphi 0, %s74
      %s77 = sphi 0, %s76
      %s91 = sphi 0, %s77
      %s95 = sphi 0, %s95
      %s97 = sphi 0, %s95
      %s98 = sphi 0, %s97
      %s112 = sphi 0, %s98
      %s116 = sphi 0, %s116
      %s118 = sphi 0, %s116
      %s119 = sphi 0, %s118
      %s133 = sphi 0, %s119
      %s139 = sphi 0, %s141
      %s142 = sphi 0, %s139
      %s143 = sphi 0, %s142
      %s159 = sphi 0, %s143
    $region4: #{tpu_custom_call.1} parent=1 // loop_header_branch
      %22 = sbr.rel (%p20) target = $region8
    $region5: #{tpu_custom_call.1} parent=1 // loop_body
      %s24 = ssub.s32 %s19, 1
      %s25 = ssub.s32 %s19, 2
      %s26 = sadd.s32 %s19, 1
      %s27 = ssub.s32 %s19, %s26
      %p28 = scmp.eq.s32.totalorder %s27, 0
      %s30 = sadd.s32 %s29, 1
      %s31 = scalar_select %p28, %s29, %s30
      %p34 = pneg %p28
      %p35 = scmp.eq.s32.totalorder %s19, 1
      %p36 = por %p34, %p35
      %p37 = scmp.ne.s32.totalorder %s29, %s32
      %p38 = scmp.eq.s32.totalorder %s19, 0
      %p39 = por %p37, %p38
      %p40 = scmp.ne.s32.totalorder %s29, %s32
      %p41 = scmp.eq.s32.totalorder %s24, 1
      %p42 = por %p40, %p41
      %p43 = scmp.ne.s32.totalorder %s32, %s33
      %p44 = scmp.eq.s32.totalorder %s24, 0
      %p45 = por %p43, %p44
      %p46 = scmp.ne.s32.totalorder %s32, %s33
      %p47 = scmp.eq.s32.totalorder %s25, 1
      %p48 = por %p46, %p47
      %p50 = scmp.ne.s32.totalorder %s33, %s49
      %p51 = scmp.eq.s32.totalorder %s25, 0
      %p52 = por %p50, %p51
      %s54 = sadd.s32 %s53, 1
      %p57 = scmp.eq.s32.totalorder %s19, 1
      %p58 = scmp.ne.s32.totalorder %s53, %s55
      %p59 = scmp.eq.s32.totalorder %s19, 0
      %p60 = por %p58, %p59
      %p61 = scmp.ne.s32.totalorder %s53, %s55
      %p62 = scmp.eq.s32.totalorder %s24, 1
      %p63 = por %p61, %p62
      %p64 = scmp.ne.s32.totalorder %s55, %s56
      %p65 = scmp.eq.s32.totalorder %s24, 0
      %p66 = por %p64, %p65
      %p67 = scmp.ne.s32.totalorder %s55, %s56
      %p68 = scmp.eq.s32.totalorder %s25, 1
      %p69 = por %p67, %p68
      %p71 = scmp.ne.s32.totalorder %s56, %s70
      %p72 = scmp.eq.s32.totalorder %s25, 0
      %p73 = por %p71, %p72
      %s75 = sadd.s32 %s74, 1
      %p78 = scmp.eq.s32.totalorder %s19, 1
      %p79 = scmp.ne.s32.totalorder %s74, %s76
      %p80 = scmp.eq.s32.totalorder %s19, 0
      %p81 = por %p79, %p80
      %p82 = scmp.ne.s32.totalorder %s74, %s76
      %p83 = scmp.eq.s32.totalorder %s24, 1
      %p84 = por %p82, %p83
      %p85 = scmp.ne.s32.totalorder %s76, %s77
      %p86 = scmp.eq.s32.totalorder %s24, 0
      %p87 = por %p85, %p86
      %p88 = scmp.ne.s32.totalorder %s76, %s77
      %p89 = scmp.eq.s32.totalorder %s25, 1
      %p90 = por %p88, %p89
      %p92 = scmp.ne.s32.totalorder %s77, %s91
      %p93 = scmp.eq.s32.totalorder %s25, 0
      %p94 = por %p92, %p93
      %s96 = sadd.s32 %s95, 1
      %p99 = scmp.eq.s32.totalorder %s19, 1
      %p100 = scmp.ne.s32.totalorder %s95, %s97
      %p101 = scmp.eq.s32.totalorder %s19, 0
      %p102 = por %p100, %p101
      %p103 = scmp.ne.s32.totalorder %s95, %s97
      %p104 = scmp.eq.s32.totalorder %s24, 1
      %p105 = por %p103, %p104
      %p106 = scmp.ne.s32.totalorder %s97, %s98
      %p107 = scmp.eq.s32.totalorder %s24, 0
      %p108 = por %p106, %p107
      %p109 = scmp.ne.s32.totalorder %s97, %s98
      %p110 = scmp.eq.s32.totalorder %s25, 1
      %p111 = por %p109, %p110
      %p113 = scmp.ne.s32.totalorder %s98, %s112
      %p114 = scmp.eq.s32.totalorder %s25, 0
      %p115 = por %p113, %p114
      %s117 = sadd.s32 %s116, 1
      %p120 = scmp.eq.s32.totalorder %s19, 1
      %p121 = scmp.ne.s32.totalorder %s116, %s118
      %p122 = scmp.eq.s32.totalorder %s19, 0
      %p123 = por %p121, %p122
      %p124 = scmp.ne.s32.totalorder %s116, %s118
      %p125 = scmp.eq.s32.totalorder %s24, 1
      %p126 = por %p124, %p125
      %p127 = scmp.ne.s32.totalorder %s118, %s119
      %p128 = scmp.eq.s32.totalorder %s24, 0
      %p129 = por %p127, %p128
      %p130 = scmp.ne.s32.totalorder %s118, %s119
      %p131 = scmp.eq.s32.totalorder %s25, 1
      %p132 = por %p130, %p131
      %p134 = scmp.ne.s32.totalorder %s119, %s133
      %p135 = scmp.eq.s32.totalorder %s25, 0
      %p136 = por %p134, %p135
      %s137 = ssub.s32 %s19, %s26
      %p138 = scmp.eq.s32.totalorder %s137, 0
      %s140 = sadd.s32 %s139, 1
      %s141 = scalar_select %p138, %s139, %s140
      %p144 = pneg %p138
      %p145 = scmp.eq.s32.totalorder %s19, 1
      %p146 = por %p144, %p145
      %p147 = scmp.ne.s32.totalorder %s139, %s142
      %p148 = scmp.eq.s32.totalorder %s19, 0
      %p149 = por %p147, %p148
      %p150 = scmp.ne.s32.totalorder %s139, %s142
      %p151 = scmp.eq.s32.totalorder %s24, 1
      %p152 = por %p150, %p151
      %p153 = scmp.ne.s32.totalorder %s142, %s143
      %p154 = scmp.eq.s32.totalorder %s24, 0
      %p155 = por %p153, %p154
      %p156 = scmp.ne.s32.totalorder %s142, %s143
      %p157 = scmp.eq.s32.totalorder %s25, 1
      %p158 = por %p156, %p157
      %p160 = scmp.ne.s32.totalorder %s143, %s159
      %p161 = scmp.eq.s32.totalorder %s25, 0
      %p162 = por %p160, %p161
      %p163 = scmp.le.s32.totalorder 1, %s19
      %p164 = scmp.lt.s32.totalorder %s19, 3
      %p165 = pnand %p163, %p164
      %p166 = pneg %p165
      // Predicated region
      $region9: #{tpu_custom_call.1} parent=5 // pred_check
        _
      $region10: #{tpu_custom_call.1} parent=5 // pred_check_branch
        %168 = sbr.rel (%p165) target = $region12
      $region11: #{tpu_custom_call.1} parent=5 // pred_region
        %s169 = ssub.s32 %s19, 1
        // Predicated region
        $region13: #{tpu_custom_call.1} parent=11 // pred_check
          %p170 = pneg %p66
        $region14: #{tpu_custom_call.1} parent=11 // pred_check_branch
          %172 = sbr.rel (%p170) target = $region16
        $region15: #{tpu_custom_call.1} parent=11 // pred_region
          %174 = vsyncadd [#allocation6], 0
          %s175 = sshll.u32 %s1, 4
          %s176 = int_to_ptr.hbm [resolvable:$true] %s175
          %s177 = sshll.u32 [#allocation5], 4
          %s178 = int_to_ptr.vmem [resolvable:$true] %s177
          %183 = dma.hbm_to_vmem [thread:$0]  %s176, 2048, %s178, [#allocation6], 128, 128, 8
        $region16: #{tpu_custom_call.1} parent=11 // pred_fallthru
          _
        // Predicated region
        $region17: #{tpu_custom_call.1} parent=11 // pred_check
          %p184 = pneg %p87
        $region18: #{tpu_custom_call.1} parent=11 // pred_check_branch
          %186 = sbr.rel (%p184) target = $region20
        $region19: #{tpu_custom_call.1} parent=11 // pred_region
          %188 = vsyncadd [#allocation6], 0
          %s190 = sshll.u32 %s2, 4
          %s191 = int_to_ptr.hbm [resolvable:$true] %s190
          %s192 = sshll.u32 [#allocation7], 4
          %s193 = int_to_ptr.vmem [resolvable:$true] %s192
          %195 = dma.hbm_to_vmem [thread:$0]  %s191, 32, %s193, [#allocation6]
        $region20: #{tpu_custom_call.1} parent=11 // pred_fallthru
          _
        // Predicated region
        $region21: #{tpu_custom_call.1} parent=11 // pred_check
          %p196 = pneg %p108
        $region22: #{tpu_custom_call.1} parent=11 // pred_check_branch
          %198 = sbr.rel (%p196) target = $region24
        $region23: #{tpu_custom_call.1} parent=11 // pred_region
          %200 = vsyncadd [#allocation9], 0
          %s201 = sshll.u32 %s3, 4
          %s202 = int_to_ptr.hbm [resolvable:$true] %s201
          %s203 = sshll.u32 [#allocation8], 4
          %s204 = int_to_ptr.vmem [resolvable:$true] %s203
          %209 = dma.hbm_to_vmem [thread:$0]  %s202, 2048, %s204, [#allocation9], 64, 64, 4
        $region24: #{tpu_custom_call.1} parent=11 // pred_fallthru
          _
        // Predicated region
        $region25: #{tpu_custom_call.1} parent=11 // pred_check
          %p210 = pneg %p129
        $region26: #{tpu_custom_call.1} parent=11 // pred_check_branch
          %212 = sbr.rel (%p210) target = $region28
        $region27: #{tpu_custom_call.1} parent=11 // pred_region
          _
        $region28: #{tpu_custom_call.1} parent=11 // pred_fallthru
          _
      $region12: #{tpu_custom_call.1} parent=5 // pred_fallthru
        _
      %p213 = scmp.lt.s32.totalorder %s19, 2
      // Predicated region
      $region29: #{tpu_custom_call.1} parent=5 // pred_check
        %p214 = pneg %p213
      $region30: #{tpu_custom_call.1} parent=5 // pred_check_branch
        %216 = sbr.rel (%p214) target = $region32
      $region31: #{tpu_custom_call.1} parent=5 // pred_region
        // Predicated region
        $region33: #{tpu_custom_call.1} parent=31 // pred_check
          %p217 = pneg %p39
        $region34: #{tpu_custom_call.1} parent=31 // pred_check_branch
          %219 = sbr.rel (%p217) target = $region36
        $region35: #{tpu_custom_call.1} parent=31 // pred_region
          %s220 = sand.u32 %s29, 1
          %s221 = scalar_lea.sflag [#allocation3], %s220
          %s222 = sand.u32 %s29, 1
          %s223 = smul.addr %s222, 256
          %s224 = scalar_lea.vmem [#allocation2], %s223
          %s225 = smul.u32 32, %s19
          %227 = vsyncadd %s221, 0
          %s228 = smul.addr %s225, 8
          %s229 = scalar_lea.hbm %s0, %s228
          %s230 = sshll.u32 %s229, 4
          %s231 = int_to_ptr.hbm [resolvable:$true] %s230
          %s232 = sshll.u32 %s224, 4
          %s233 = int_to_ptr.vmem [resolvable:$true] %s232
          %238 = dma.hbm_to_vmem [thread:$0]  %s231, 4096, %s233, %s221, 128, 128, 8
        $region36: #{tpu_custom_call.1} parent=31 // pred_fallthru
          _
      $region32: #{tpu_custom_call.1} parent=5 // pred_fallthru
        _
      %p239 = scmp.le.s32.totalorder 1, %s19
      %p240 = scmp.lt.s32.totalorder %s19, 3
      %p241 = pnand %p239, %p240
      %p242 = pneg %p241
      // Predicated region
      $region37: #{tpu_custom_call.1} parent=5 // pred_check
        _
      $region38: #{tpu_custom_call.1} parent=5 // pred_check_branch
        %244 = sbr.rel (%p241) target = $region40
      $region39: #{tpu_custom_call.1} parent=5 // pred_region
        %s245 = ssub.s32 %s19, 1
        %s246 = sand.u32 %s32, 1
        %s247 = scalar_lea.sflag [#allocation3], %s246
        %s248 = sand.u32 %s32, 1
        %s249 = smul.addr %s248, 256
        %s250 = scalar_lea.vmem [#allocation2], %s249
        // Predicated region
        $region41: #{tpu_custom_call.1} parent=39 // pred_check
          %p251 = pneg %p45
        $region42: #{tpu_custom_call.1} parent=39 // pred_check_branch
          %253 = sbr.rel (%p251) target = $region44
        $region43: #{tpu_custom_call.1} parent=39 // pred_region
          %255 = dma.done %s247, 4096
        $region44: #{tpu_custom_call.1} parent=39 // pred_fallthru
          _
        // Predicated region
        $region45: #{tpu_custom_call.1} parent=39 // pred_check
          %p256 = pneg %p66
        $region46: #{tpu_custom_call.1} parent=39 // pred_check_branch
          %258 = sbr.rel (%p256) target = $region48
        $region47: #{tpu_custom_call.1} parent=39 // pred_region
          %260 = dma.done [#allocation6], 2048
        $region48: #{tpu_custom_call.1} parent=39 // pred_fallthru
          _
        // Predicated region
        $region49: #{tpu_custom_call.1} parent=39 // pred_check
          %p261 = pneg %p87
        $region50: #{tpu_custom_call.1} parent=39 // pred_check_branch
          %263 = sbr.rel (%p261) target = $region52
        $region51: #{tpu_custom_call.1} parent=39 // pred_region
          %265 = dma.done [#allocation6], 32
        $region52: #{tpu_custom_call.1} parent=39 // pred_fallthru
          _
        // Predicated region
        $region53: #{tpu_custom_call.1} parent=39 // pred_check
          %p266 = pneg %p108
        $region54: #{tpu_custom_call.1} parent=39 // pred_check_branch
          %268 = sbr.rel (%p266) target = $region56
        $region55: #{tpu_custom_call.1} parent=39 // pred_region
          %270 = dma.done [#allocation9], 2048
        $region56: #{tpu_custom_call.1} parent=39 // pred_fallthru
          _
        %s271 = sand.u32 %s32, 1
        %s272 = scalar_lea.sflag [#allocation3], %s271
        %s273 = sand.u32 %s32, 1
        %s274 = smul.addr %s273, 256
        %s275 = scalar_lea.vmem [#allocation2], %s274
        %p276 = pneg %p45
        %p277 = pneg %p42
        %p278 = pneg %p66
        %p279 = pneg %p63
        %p280 = pneg %p87
        %p281 = pneg %p84
        %p282 = pneg %p108
        %p283 = pneg %p105
        %p284 = pneg %p129
        %p285 = pneg %p126
        %p286 = pneg %p155
        %p287 = pneg %p152
        %s288 = sand.u32 %s142, 1
        %s289 = scalar_lea.sflag [#allocation4], %s288
        %s290 = sand.u32 %s142, 1
        %s291 = smul.addr %s290, 256
        %s292 = scalar_lea.vmem [#allocation10], %s291
        %s293 = smul.u32 32, %s24
        %s294 = smul.u32 32, %s24
        %v295 = vld [vmem:[%s250] sm:$0xff]
        %v296 = vld [vmem:[%s250 + $0x8] sm:$0xff]
        %v297 = vld [vmem:[%s250 + $0x10] sm:$0xff]
        %v298 = vld [vmem:[%s250 + $0x18] sm:$0xff]
        %v299 = vld [vmem:[%s250 + $0x20] sm:$0xff]
        %v300 = vld [vmem:[%s250 + $0x28] sm:$0xff]
        %v301 = vld [vmem:[%s250 + $0x30] sm:$0xff]
        %v302 = vld [vmem:[%s250 + $0x38] sm:$0xff]
        %v303 = vld [vmem:[%s250 + $0x40] sm:$0xff]
        %v304 = vld [vmem:[%s250 + $0x48] sm:$0xff]
        %v305 = vld [vmem:[%s250 + $0x50] sm:$0xff]
        %v306 = vld [vmem:[%s250 + $0x58] sm:$0xff]
        %v307 = vld [vmem:[%s250 + $0x60] sm:$0xff]
        %v308 = vld [vmem:[%s250 + $0x68] sm:$0xff]
        %v309 = vld [vmem:[%s250 + $0x70] sm:$0xff]
        %v310 = vld [vmem:[%s250 + $0x78] sm:$0xff]
        %v311 = vld [vmem:[%s250 + $0x80] sm:$0xff]
        %v312 = vld [vmem:[%s250 + $0x88] sm:$0xff]
        %v313 = vld [vmem:[%s250 + $0x90] sm:$0xff]
        %v314 = vld [vmem:[%s250 + $0x98] sm:$0xff]
        %v315 = vld [vmem:[%s250 + $0xa0] sm:$0xff]
        %v316 = vld [vmem:[%s250 + $0xa8] sm:$0xff]
        %v317 = vld [vmem:[%s250 + $0xb0] sm:$0xff]
        %v318 = vld [vmem:[%s250 + $0xb8] sm:$0xff]
        %v319 = vld [vmem:[%s250 + $0xc0] sm:$0xff]
        %v320 = vld [vmem:[%s250 + $0xc8] sm:$0xff]
        %v321 = vld [vmem:[%s250 + $0xd0] sm:$0xff]
        %v322 = vld [vmem:[%s250 + $0xd8] sm:$0xff]
        %v323 = vld [vmem:[%s250 + $0xe0] sm:$0xff]
        %v324 = vld [vmem:[%s250 + $0xe8] sm:$0xff]
        %v325 = vld [vmem:[%s250 + $0xf0] sm:$0xff]
        %v326 = vld [vmem:[%s250 + $0xf8] sm:$0xff]
        %v327 = vpack.c.bf16 %v296, %v295
        %v328 = vpack.c.bf16 %v298, %v297
        %v329 = vpack.c.bf16 %v300, %v299
        %v330 = vpack.c.bf16 %v302, %v301
        %v331 = vpack.c.bf16 %v304, %v303
        %v332 = vpack.c.bf16 %v306, %v305
        %v333 = vpack.c.bf16 %v308, %v307
        %v334 = vpack.c.bf16 %v310, %v309
        %v335 = vpack.c.bf16 %v312, %v311
        %v336 = vpack.c.bf16 %v314, %v313
        %v337 = vpack.c.bf16 %v316, %v315
        %v338 = vpack.c.bf16 %v318, %v317
        %v339 = vpack.c.bf16 %v320, %v319
        %v340 = vpack.c.bf16 %v322, %v321
        %v341 = vpack.c.bf16 %v324, %v323
        %v342 = vpack.c.bf16 %v326, %v325
        %v343 = vld [vmem:[#allocation5] sm:$0xff]
        %v344 = vld [vmem:[#allocation5 + $0x8] sm:$0xff]
        %v345 = vld [vmem:[#allocation5 + $0x10] sm:$0xff]
        %v346 = vld [vmem:[#allocation5 + $0x18] sm:$0xff]
        %v347 = vld [vmem:[#allocation5 + $0x20] sm:$0xff]
        %v348 = vld [vmem:[#allocation5 + $0x28] sm:$0xff]
        %v349 = vld [vmem:[#allocation5 + $0x30] sm:$0xff]
        %v350 = vld [vmem:[#allocation5 + $0x38] sm:$0xff]
        %v351 = vld [vmem:[#allocation5 + $0x40] sm:$0xff]
        %v352 = vld [vmem:[#allocation5 + $0x48] sm:$0xff]
        %v353 = vld [vmem:[#allocation5 + $0x50] sm:$0xff]
        %v354 = vld [vmem:[#allocation5 + $0x58] sm:$0xff]
        %v355 = vld [vmem:[#allocation5 + $0x60] sm:$0xff]
        %v356 = vld [vmem:[#allocation5 + $0x68] sm:$0xff]
        %v357 = vld [vmem:[#allocation5 + $0x70] sm:$0xff]
        %v358 = vld [vmem:[#allocation5 + $0x78] sm:$0xff]
        %v359 = vld [vmem:[#allocation7] sm:$0x3]
        %v361 = vperm.slane %v359, 0
        %v362 = vperm.slane %v359, 1
        %v381 = vunpack.c.l.b16 %v343
        %v382 = vunpack.c.h.b16 %v343
        %v383 = vunpack.c.l.b16 %v344
        %v384 = vunpack.c.h.b16 %v344
        %v385 = vunpack.c.l.b16 %v345
        %v386 = vunpack.c.h.b16 %v345
        %v387 = vunpack.c.l.b16 %v346
        %v388 = vunpack.c.h.b16 %v346
        %v389 = vunpack.c.l.b16 %v347
        %v390 = vunpack.c.h.b16 %v347
        %v391 = vunpack.c.l.b16 %v348
        %v392 = vunpack.c.h.b16 %v348
        %v393 = vunpack.c.l.b16 %v349
        %v394 = vunpack.c.h.b16 %v349
        %v395 = vunpack.c.l.b16 %v350
        %v396 = vunpack.c.h.b16 %v350
        %v397 = vunpack.c.l.b16 %v351
        %v398 = vunpack.c.h.b16 %v351
        %v399 = vunpack.c.l.b16 %v352
        %v400 = vunpack.c.h.b16 %v352
        %v401 = vunpack.c.l.b16 %v353
        %v402 = vunpack.c.h.b16 %v353
        %v403 = vunpack.c.l.b16 %v354
        %v404 = vunpack.c.h.b16 %v354
        %v405 = vunpack.c.l.b16 %v355
        %v406 = vunpack.c.h.b16 %v355
        %v407 = vunpack.c.l.b16 %v356
        %v408 = vunpack.c.h.b16 %v356
        %v409 = vunpack.c.l.b16 %v357
        %v410 = vunpack.c.h.b16 %v357
        %v411 = vunpack.c.l.b16 %v358
        %v412 = vunpack.c.h.b16 %v358
        %v413 = vpack.c.b16 %v383, %v381
        %v414 = vpack.c.b16 %v384, %v382
        %v415 = vpack.c.b16 %v387, %v385
        %v416 = vpack.c.b16 %v388, %v386
        %v417 = vpack.c.b16 %v391, %v389
        %v418 = vpack.c.b16 %v392, %v390
        %v419 = vpack.c.b16 %v395, %v393
        %v420 = vpack.c.b16 %v396, %v394
        %v421 = vpack.c.b16 %v399, %v397
        %v422 = vpack.c.b16 %v400, %v398
        %v423 = vpack.c.b16 %v403, %v401
        %v424 = vpack.c.b16 %v404, %v402
        %v425 = vpack.c.b16 %v407, %v405
        %v426 = vpack.c.b16 %v408, %v406
        %v427 = vpack.c.b16 %v411, %v409
        %v428 = vpack.c.b16 %v412, %v410
        %445 = vmatpush.bf16.msra.mxu0 %v427
        %446 = vmatpush.bf16.msra.mxu0 %v425
        %447 = vmatpush.bf16.msra.mxu0 %v423
        %448 = vmatpush.bf16.msra.mxu0 %v421
        %449 = vmatpush.bf16.msra.mxu0 %v419
        %450 = vmatpush.bf16.msra.mxu0 %v417
        %451 = vmatpush.bf16.msra.mxu0 %v415
        %452 = vmatpush.bf16.msra.mxu0 %v413
        %453 = vmatmul.bf16.gmra.mxu0 %v327
        %v454 = vpop.f32.mrf.mxu0
        %v455 = vadd.f32 %v361, %v454
        %v456 = vpop.f32.mrf.mxu0
        %v457 = vadd.f32 %v361, %v456
        %458 = vmatmul.bf16.gmra.mxu0 %v328
        %v459 = vpop.f32.mrf.mxu0
        %v460 = vadd.f32 %v361, %v459
        %v461 = vpop.f32.mrf.mxu0
        %v462 = vadd.f32 %v361, %v461
        %463 = vmatmul.bf16.gmra.mxu0 %v329
        %v464 = vpop.f32.mrf.mxu0
        %v465 = vadd.f32 %v361, %v464
        %v466 = vpop.f32.mrf.mxu0
        %v467 = vadd.f32 %v361, %v466
        %468 = vmatmul.bf16.gmra.mxu0 %v330
        %v469 = vpop.f32.mrf.mxu0
        %v470 = vadd.f32 %v361, %v469
        %v471 = vpop.f32.mrf.mxu0
        %v472 = vadd.f32 %v361, %v471
        %473 = vmatmul.bf16.gmra.mxu0 %v331
        %v474 = vpop.f32.mrf.mxu0
        %v475 = vadd.f32 %v361, %v474
        %v476 = vpop.f32.mrf.mxu0
        %v477 = vadd.f32 %v361, %v476
        %478 = vmatmul.bf16.gmra.mxu0 %v332
        %v479 = vpop.f32.mrf.mxu0
        %v480 = vadd.f32 %v361, %v479
        %v481 = vpop.f32.mrf.mxu0
        %v482 = vadd.f32 %v361, %v481
        %483 = vmatmul.bf16.gmra.mxu0 %v333
        %v484 = vpop.f32.mrf.mxu0
        %v485 = vadd.f32 %v361, %v484
        %v486 = vpop.f32.mrf.mxu0
        %v487 = vadd.f32 %v361, %v486
        %488 = vmatmul.bf16.gmra.mxu0 %v334
        %v489 = vpop.f32.mrf.mxu0
        %v490 = vadd.f32 %v361, %v489
        %v491 = vpop.f32.mrf.mxu0
        %v492 = vadd.f32 %v361, %v491
        %493 = vmatmul.bf16.gmra.mxu0 %v335
        %v494 = vpop.f32.mrf.mxu0
        %v495 = vadd.f32 %v361, %v494
        %v496 = vpop.f32.mrf.mxu0
        %v497 = vadd.f32 %v361, %v496
        %498 = vmatmul.bf16.gmra.mxu0 %v336
        %v499 = vpop.f32.mrf.mxu0
        %v500 = vadd.f32 %v361, %v499
        %v501 = vpop.f32.mrf.mxu0
        %v502 = vadd.f32 %v361, %v501
        %503 = vmatmul.bf16.gmra.mxu0 %v337
        %v504 = vpop.f32.mrf.mxu0
        %v505 = vadd.f32 %v361, %v504
        %v506 = vpop.f32.mrf.mxu0
        %v507 = vadd.f32 %v361, %v506
        %508 = vmatmul.bf16.gmra.mxu0 %v338
        %v509 = vpop.f32.mrf.mxu0
        %v510 = vadd.f32 %v361, %v509
        %v511 = vpop.f32.mrf.mxu0
        %v512 = vadd.f32 %v361, %v511
        %513 = vmatmul.bf16.gmra.mxu0 %v339
        %v514 = vpop.f32.mrf.mxu0
        %v515 = vadd.f32 %v361, %v514
        %v516 = vpop.f32.mrf.mxu0
        %v517 = vadd.f32 %v361, %v516
        %518 = vmatmul.bf16.gmra.mxu0 %v340
        %v519 = vpop.f32.mrf.mxu0
        %v520 = vadd.f32 %v361, %v519
        %v521 = vpop.f32.mrf.mxu0
        %v522 = vadd.f32 %v361, %v521
        %523 = vmatmul.bf16.gmra.mxu0 %v341
        %v524 = vpop.f32.mrf.mxu0
        %v525 = vadd.f32 %v361, %v524
        %v526 = vpop.f32.mrf.mxu0
        %v527 = vadd.f32 %v361, %v526
        %528 = vmatmul.bf16.gmra.mxu0 %v342
        %v529 = vpop.f32.mrf.mxu0
        %v530 = vadd.f32 %v361, %v529
        %v531 = vpop.f32.mrf.mxu0
        %v532 = vadd.f32 %v361, %v531
        %533 = vdwg.mxu0
        %534 = vmatpush.bf16.msra.mxu0 %v428
        %535 = vmatpush.bf16.msra.mxu0 %v426
        %536 = vmatpush.bf16.msra.mxu0 %v424
        %537 = vmatpush.bf16.msra.mxu0 %v422
        %538 = vmatpush.bf16.msra.mxu0 %v420
        %539 = vmatpush.bf16.msra.mxu0 %v418
        %540 = vmatpush.bf16.msra.mxu0 %v416
        %541 = vmatpush.bf16.msra.mxu0 %v414
        %542 = vmatmul.bf16.gmra.mxu0 %v327
        %v543 = vpop.f32.mrf.mxu0
        %v544 = vadd.f32 %v362, %v543
        %v545 = vpop.f32.mrf.mxu0
        %v546 = vadd.f32 %v362, %v545
        %547 = vmatmul.bf16.gmra.mxu0 %v328
        %v548 = vpop.f32.mrf.mxu0
        %v549 = vadd.f32 %v362, %v548
        %v550 = vpop.f32.mrf.mxu0
        %v551 = vadd.f32 %v362, %v550
        %552 = vmatmul.bf16.gmra.mxu0 %v329
        %v553 = vpop.f32.mrf.mxu0
        %v554 = vadd.f32 %v362, %v553
        %v555 = vpop.f32.mrf.mxu0
        %v556 = vadd.f32 %v362, %v555
        %557 = vmatmul.bf16.gmra.mxu0 %v330
        %v558 = vpop.f32.mrf.mxu0
        %v559 = vadd.f32 %v362, %v558
        %v560 = vpop.f32.mrf.mxu0
        %v561 = vadd.f32 %v362, %v560
        %562 = vmatmul.bf16.gmra.mxu0 %v331
        %v563 = vpop.f32.mrf.mxu0
        %v564 = vadd.f32 %v362, %v563
        %v565 = vpop.f32.mrf.mxu0
        %v566 = vadd.f32 %v362, %v565
        %567 = vmatmul.bf16.gmra.mxu0 %v332
        %v568 = vpop.f32.mrf.mxu0
        %v569 = vadd.f32 %v362, %v568
        %v570 = vpop.f32.mrf.mxu0
        %v571 = vadd.f32 %v362, %v570
        %572 = vmatmul.bf16.gmra.mxu0 %v333
        %v573 = vpop.f32.mrf.mxu0
        %v574 = vadd.f32 %v362, %v573
        %v575 = vpop.f32.mrf.mxu0
        %v576 = vadd.f32 %v362, %v575
        %577 = vmatmul.bf16.gmra.mxu0 %v334
        %v578 = vpop.f32.mrf.mxu0
        %v579 = vadd.f32 %v362, %v578
        %v580 = vpop.f32.mrf.mxu0
        %v581 = vadd.f32 %v362, %v580
        %582 = vmatmul.bf16.gmra.mxu0 %v335
        %v583 = vpop.f32.mrf.mxu0
        %v584 = vadd.f32 %v362, %v583
        %v585 = vpop.f32.mrf.mxu0
        %v586 = vadd.f32 %v362, %v585
        %587 = vmatmul.bf16.gmra.mxu0 %v336
        %v588 = vpop.f32.mrf.mxu0
        %v589 = vadd.f32 %v362, %v588
        %v590 = vpop.f32.mrf.mxu0
        %v591 = vadd.f32 %v362, %v590
        %592 = vmatmul.bf16.gmra.mxu0 %v337
        %v593 = vpop.f32.mrf.mxu0
        %v594 = vadd.f32 %v362, %v593
        %v595 = vpop.f32.mrf.mxu0
        %v596 = vadd.f32 %v362, %v595
        %597 = vmatmul.bf16.gmra.mxu0 %v338
        %v598 = vpop.f32.mrf.mxu0
        %v599 = vadd.f32 %v362, %v598
        %v600 = vpop.f32.mrf.mxu0
        %v601 = vadd.f32 %v362, %v600
        %602 = vmatmul.bf16.gmra.mxu0 %v339
        %v603 = vpop.f32.mrf.mxu0
        %v604 = vadd.f32 %v362, %v603
        %v605 = vpop.f32.mrf.mxu0
        %v606 = vadd.f32 %v362, %v605
        %607 = vmatmul.bf16.gmra.mxu0 %v340
        %v608 = vpop.f32.mrf.mxu0
        %v609 = vadd.f32 %v362, %v608
        %v610 = vpop.f32.mrf.mxu0
        %v611 = vadd.f32 %v362, %v610
        %612 = vmatmul.bf16.gmra.mxu0 %v341
        %v613 = vpop.f32.mrf.mxu0
        %v614 = vadd.f32 %v362, %v613
        %v615 = vpop.f32.mrf.mxu0
        %v616 = vadd.f32 %v362, %v615
        %617 = vmatmul.bf16.gmra.mxu0 %v342
        %v618 = vpop.f32.mrf.mxu0
        %v619 = vadd.f32 %v362, %v618
        %v620 = vpop.f32.mrf.mxu0
        %v621 = vadd.f32 %v362, %v620
        %622 = vdwg.mxu0
        %v623 = vmul.f32 %v455, %v455
        %v624 = vmul.f32 %v544, %v544
        %v625 = vmul.f32 %v457, %v457
        %v626 = vmul.f32 %v546, %v546
        %v627 = vmul.f32 %v460, %v460
        %v628 = vmul.f32 %v549, %v549
        %v629 = vmul.f32 %v462, %v462
        %v630 = vmul.f32 %v551, %v551
        %v631 = vmul.f32 %v465, %v465
        %v632 = vmul.f32 %v554, %v554
        %v633 = vmul.f32 %v467, %v467
        %v634 = vmul.f32 %v556, %v556
        %v635 = vmul.f32 %v470, %v470
        %v636 = vmul.f32 %v559, %v559
        %v637 = vmul.f32 %v472, %v472
        %v638 = vmul.f32 %v561, %v561
        %v639 = vmul.f32 %v475, %v475
        %v640 = vmul.f32 %v564, %v564
        %v641 = vmul.f32 %v477, %v477
        %v642 = vmul.f32 %v566, %v566
        %v643 = vmul.f32 %v480, %v480
        %v644 = vmul.f32 %v569, %v569
        %v645 = vmul.f32 %v482, %v482
        %v646 = vmul.f32 %v571, %v571
        %v647 = vmul.f32 %v485, %v485
        %v648 = vmul.f32 %v574, %v574
        %v649 = vmul.f32 %v487, %v487
        %v650 = vmul.f32 %v576, %v576
        %v651 = vmul.f32 %v490, %v490
        %v652 = vmul.f32 %v579, %v579
        %v653 = vmul.f32 %v492, %v492
        %v654 = vmul.f32 %v581, %v581
        %v655 = vmul.f32 %v495, %v495
        %v656 = vmul.f32 %v584, %v584
        %v657 = vmul.f32 %v497, %v497
        %v658 = vmul.f32 %v586, %v586
        %v659 = vmul.f32 %v500, %v500
        %v660 = vmul.f32 %v589, %v589
        %v661 = vmul.f32 %v502, %v502
        %v662 = vmul.f32 %v591, %v591
        %v663 = vmul.f32 %v505, %v505
        %v664 = vmul.f32 %v594, %v594
        %v665 = vmul.f32 %v507, %v507
        %v666 = vmul.f32 %v596, %v596
        %v667 = vmul.f32 %v510, %v510
        %v668 = vmul.f32 %v599, %v599
        %v669 = vmul.f32 %v512, %v512
        %v670 = vmul.f32 %v601, %v601
        %v671 = vmul.f32 %v515, %v515
        %v672 = vmul.f32 %v604, %v604
        %v673 = vmul.f32 %v517, %v517
        %v674 = vmul.f32 %v606, %v606
        %v675 = vmul.f32 %v520, %v520
        %v676 = vmul.f32 %v609, %v609
        %v677 = vmul.f32 %v522, %v522
        %v678 = vmul.f32 %v611, %v611
        %v679 = vmul.f32 %v525, %v525
        %v680 = vmul.f32 %v614, %v614
        %v681 = vmul.f32 %v527, %v527
        %v682 = vmul.f32 %v616, %v616
        %v683 = vmul.f32 %v530, %v530
        %v684 = vmul.f32 %v619, %v619
        %v685 = vmul.f32 %v532, %v532
        %v686 = vmul.f32 %v621, %v621
        %v687 = vmul.f32 %v455, %v623
        %v688 = vmul.f32 %v544, %v624
        %v689 = vmul.f32 %v457, %v625
        %v690 = vmul.f32 %v546, %v626
        %v691 = vmul.f32 %v460, %v627
        %v692 = vmul.f32 %v549, %v628
        %v693 = vmul.f32 %v462, %v629
        %v694 = vmul.f32 %v551, %v630
        %v695 = vmul.f32 %v465, %v631
        %v696 = vmul.f32 %v554, %v632
        %v697 = vmul.f32 %v467, %v633
        %v698 = vmul.f32 %v556, %v634
        %v699 = vmul.f32 %v470, %v635
        %v700 = vmul.f32 %v559, %v636
        %v701 = vmul.f32 %v472, %v637
        %v702 = vmul.f32 %v561, %v638
        %v703 = vmul.f32 %v475, %v639
        %v704 = vmul.f32 %v564, %v640
        %v705 = vmul.f32 %v477, %v641
        %v706 = vmul.f32 %v566, %v642
        %v707 = vmul.f32 %v480, %v643
        %v708 = vmul.f32 %v569, %v644
        %v709 = vmul.f32 %v482, %v645
        %v710 = vmul.f32 %v571, %v646
        %v711 = vmul.f32 %v485, %v647
        %v712 = vmul.f32 %v574, %v648
        %v713 = vmul.f32 %v487, %v649
        %v714 = vmul.f32 %v576, %v650
        %v715 = vmul.f32 %v490, %v651
        %v716 = vmul.f32 %v579, %v652
        %v717 = vmul.f32 %v492, %v653
        %v718 = vmul.f32 %v581, %v654
        %v719 = vmul.f32 %v495, %v655
        %v720 = vmul.f32 %v584, %v656
        %v721 = vmul.f32 %v497, %v657
        %v722 = vmul.f32 %v586, %v658
        %v723 = vmul.f32 %v500, %v659
        %v724 = vmul.f32 %v589, %v660
        %v725 = vmul.f32 %v502, %v661
        %v726 = vmul.f32 %v591, %v662
        %v727 = vmul.f32 %v505, %v663
        %v728 = vmul.f32 %v594, %v664
        %v729 = vmul.f32 %v507, %v665
        %v730 = vmul.f32 %v596, %v666
        %v731 = vmul.f32 %v510, %v667
        %v732 = vmul.f32 %v599, %v668
        %v733 = vmul.f32 %v512, %v669
        %v734 = vmul.f32 %v601, %v670
        %v735 = vmul.f32 %v515, %v671
        %v736 = vmul.f32 %v604, %v672
        %v737 = vmul.f32 %v517, %v673
        %v738 = vmul.f32 %v606, %v674
        %v739 = vmul.f32 %v520, %v675
        %v740 = vmul.f32 %v609, %v676
        %v741 = vmul.f32 %v522, %v677
        %v742 = vmul.f32 %v611, %v678
        %v743 = vmul.f32 %v525, %v679
        %v744 = vmul.f32 %v614, %v680
        %v745 = vmul.f32 %v527, %v681
        %v746 = vmul.f32 %v616, %v682
        %v747 = vmul.f32 %v530, %v683
        %v748 = vmul.f32 %v619, %v684
        %v749 = vmul.f32 %v532, %v685
        %v750 = vmul.f32 %v621, %v686
        %v751 = vmul.f32 %v687, 0.044715
        %v752 = vmul.f32 %v688, 0.044715
        %v753 = vmul.f32 %v689, 0.044715
        %v754 = vmul.f32 %v690, 0.044715
        %v755 = vmul.f32 %v691, 0.044715
        %v756 = vmul.f32 %v692, 0.044715
        %v757 = vmul.f32 %v693, 0.044715
        %v758 = vmul.f32 %v694, 0.044715
        %v759 = vmul.f32 %v695, 0.044715
        %v760 = vmul.f32 %v696, 0.044715
        %v761 = vmul.f32 %v697, 0.044715
        %v762 = vmul.f32 %v698, 0.044715
        %v763 = vmul.f32 %v699, 0.044715
        %v764 = vmul.f32 %v700, 0.044715
        %v765 = vmul.f32 %v701, 0.044715
        %v766 = vmul.f32 %v702, 0.044715
        %v767 = vmul.f32 %v703, 0.044715
        %v768 = vmul.f32 %v704, 0.044715
        %v769 = vmul.f32 %v705, 0.044715
        %v770 = vmul.f32 %v706, 0.044715
        %v771 = vmul.f32 %v707, 0.044715
        %v772 = vmul.f32 %v708, 0.044715
        %v773 = vmul.f32 %v709, 0.044715
        %v774 = vmul.f32 %v710, 0.044715
        %v775 = vmul.f32 %v711, 0.044715
        %v776 = vmul.f32 %v712, 0.044715
        %v777 = vmul.f32 %v713, 0.044715
        %v778 = vmul.f32 %v714, 0.044715
        %v779 = vmul.f32 %v715, 0.044715
        %v780 = vmul.f32 %v716, 0.044715
        %v781 = vmul.f32 %v717, 0.044715
        %v782 = vmul.f32 %v718, 0.044715
        %v783 = vmul.f32 %v719, 0.044715
        %v784 = vmul.f32 %v720, 0.044715
        %v785 = vmul.f32 %v721, 0.044715
        %v786 = vmul.f32 %v722, 0.044715
        %v787 = vmul.f32 %v723, 0.044715
        %v788 = vmul.f32 %v724, 0.044715
        %v789 = vmul.f32 %v725, 0.044715
        %v790 = vmul.f32 %v726, 0.044715
        %v791 = vmul.f32 %v727, 0.044715
        %v792 = vmul.f32 %v728, 0.044715
        %v793 = vmul.f32 %v729, 0.044715
        %v794 = vmul.f32 %v730, 0.044715
        %v795 = vmul.f32 %v731, 0.044715
        %v796 = vmul.f32 %v732, 0.044715
        %v797 = vmul.f32 %v733, 0.044715
        %v798 = vmul.f32 %v734, 0.044715
        %v799 = vmul.f32 %v735, 0.044715
        %v800 = vmul.f32 %v736, 0.044715
        %v801 = vmul.f32 %v737, 0.044715
        %v802 = vmul.f32 %v738, 0.044715
        %v803 = vmul.f32 %v739, 0.044715
        %v804 = vmul.f32 %v740, 0.044715
        %v805 = vmul.f32 %v741, 0.044715
        %v806 = vmul.f32 %v742, 0.044715
        %v807 = vmul.f32 %v743, 0.044715
        %v808 = vmul.f32 %v744, 0.044715
        %v809 = vmul.f32 %v745, 0.044715
        %v810 = vmul.f32 %v746, 0.044715
        %v811 = vmul.f32 %v747, 0.044715
        %v812 = vmul.f32 %v748, 0.044715
        %v813 = vmul.f32 %v749, 0.044715
        %v814 = vmul.f32 %v750, 0.044715
        %v815 = vadd.f32 %v455, %v751
        %v816 = vadd.f32 %v544, %v752
        %v817 = vadd.f32 %v457, %v753
        %v818 = vadd.f32 %v546, %v754
        %v819 = vadd.f32 %v460, %v755
        %v820 = vadd.f32 %v549, %v756
        %v821 = vadd.f32 %v462, %v757
        %v822 = vadd.f32 %v551, %v758
        %v823 = vadd.f32 %v465, %v759
        %v824 = vadd.f32 %v554, %v760
        %v825 = vadd.f32 %v467, %v761
        %v826 = vadd.f32 %v556, %v762
        %v827 = vadd.f32 %v470, %v763
        %v828 = vadd.f32 %v559, %v764
        %v829 = vadd.f32 %v472, %v765
        %v830 = vadd.f32 %v561, %v766
        %v831 = vadd.f32 %v475, %v767
        %v832 = vadd.f32 %v564, %v768
        %v833 = vadd.f32 %v477, %v769
        %v834 = vadd.f32 %v566, %v770
        %v835 = vadd.f32 %v480, %v771
        %v836 = vadd.f32 %v569, %v772
        %v837 = vadd.f32 %v482, %v773
        %v838 = vadd.f32 %v571, %v774
        %v839 = vadd.f32 %v485, %v775
        %v840 = vadd.f32 %v574, %v776
        %v841 = vadd.f32 %v487, %v777
        %v842 = vadd.f32 %v576, %v778
        %v843 = vadd.f32 %v490, %v779
        %v844 = vadd.f32 %v579, %v780
        %v845 = vadd.f32 %v492, %v781
        %v846 = vadd.f32 %v581, %v782
        %v847 = vadd.f32 %v495, %v783
        %v848 = vadd.f32 %v584, %v784
        %v849 = vadd.f32 %v497, %v785
        %v850 = vadd.f32 %v586, %v786
        %v851 = vadd.f32 %v500, %v787
        %v852 = vadd.f32 %v589, %v788
        %v853 = vadd.f32 %v502, %v789
        %v854 = vadd.f32 %v591, %v790
        %v855 = vadd.f32 %v505, %v791
        %v856 = vadd.f32 %v594, %v792
        %v857 = vadd.f32 %v507, %v793
        %v858 = vadd.f32 %v596, %v794
        %v859 = vadd.f32 %v510, %v795
        %v860 = vadd.f32 %v599, %v796
        %v861 = vadd.f32 %v512, %v797
        %v862 = vadd.f32 %v601, %v798
        %v863 = vadd.f32 %v515, %v799
        %v864 = vadd.f32 %v604, %v800
        %v865 = vadd.f32 %v517, %v801
        %v866 = vadd.f32 %v606, %v802
        %v867 = vadd.f32 %v520, %v803
        %v868 = vadd.f32 %v609, %v804
        %v869 = vadd.f32 %v522, %v805
        %v870 = vadd.f32 %v611, %v806
        %v871 = vadd.f32 %v525, %v807
        %v872 = vadd.f32 %v614, %v808
        %v873 = vadd.f32 %v527, %v809
        %v874 = vadd.f32 %v616, %v810
        %v875 = vadd.f32 %v530, %v811
        %v876 = vadd.f32 %v619, %v812
        %v877 = vadd.f32 %v532, %v813
        %v878 = vadd.f32 %v621, %v814
        %v879 = vmul.f32 %v815, 0.7978846
        %v880 = vmul.f32 %v816, 0.7978846
        %v881 = vmul.f32 %v817, 0.7978846
        %v882 = vmul.f32 %v818, 0.7978846
        %v883 = vmul.f32 %v819, 0.7978846
        %v884 = vmul.f32 %v820, 0.7978846
        %v885 = vmul.f32 %v821, 0.7978846
        %v886 = vmul.f32 %v822, 0.7978846
        %v887 = vmul.f32 %v823, 0.7978846
        %v888 = vmul.f32 %v824, 0.7978846
        %v889 = vmul.f32 %v825, 0.7978846
        %v890 = vmul.f32 %v826, 0.7978846
        %v891 = vmul.f32 %v827, 0.7978846
        %v892 = vmul.f32 %v828, 0.7978846
        %v893 = vmul.f32 %v829, 0.7978846
        %v894 = vmul.f32 %v830, 0.7978846
        %v895 = vmul.f32 %v831, 0.7978846
        %v896 = vmul.f32 %v832, 0.7978846
        %v897 = vmul.f32 %v833, 0.7978846
        %v898 = vmul.f32 %v834, 0.7978846
        %v899 = vmul.f32 %v835, 0.7978846
        %v900 = vmul.f32 %v836, 0.7978846
        %v901 = vmul.f32 %v837, 0.7978846
        %v902 = vmul.f32 %v838, 0.7978846
        %v903 = vmul.f32 %v839, 0.7978846
        %v904 = vmul.f32 %v840, 0.7978846
        %v905 = vmul.f32 %v841, 0.7978846
        %v906 = vmul.f32 %v842, 0.7978846
        %v907 = vmul.f32 %v843, 0.7978846
        %v908 = vmul.f32 %v844, 0.7978846
        %v909 = vmul.f32 %v845, 0.7978846
        %v910 = vmul.f32 %v846, 0.7978846
        %v911 = vmul.f32 %v847, 0.7978846
        %v912 = vmul.f32 %v848, 0.7978846
        %v913 = vmul.f32 %v849, 0.7978846
        %v914 = vmul.f32 %v850, 0.7978846
        %v915 = vmul.f32 %v851, 0.7978846
        %v916 = vmul.f32 %v852, 0.7978846
        %v917 = vmul.f32 %v853, 0.7978846
        %v918 = vmul.f32 %v854, 0.7978846
        %v919 = vmul.f32 %v855, 0.7978846
        %v920 = vmul.f32 %v856, 0.7978846
        %v921 = vmul.f32 %v857, 0.7978846
        %v922 = vmul.f32 %v858, 0.7978846
        %v923 = vmul.f32 %v859, 0.7978846
        %v924 = vmul.f32 %v860, 0.7978846
        %v925 = vmul.f32 %v861, 0.7978846
        %v926 = vmul.f32 %v862, 0.7978846
        %v927 = vmul.f32 %v863, 0.7978846
        %v928 = vmul.f32 %v864, 0.7978846
        %v929 = vmul.f32 %v865, 0.7978846
        %v930 = vmul.f32 %v866, 0.7978846
        %v931 = vmul.f32 %v867, 0.7978846
        %v932 = vmul.f32 %v868, 0.7978846
        %v933 = vmul.f32 %v869, 0.7978846
        %v934 = vmul.f32 %v870, 0.7978846
        %v935 = vmul.f32 %v871, 0.7978846
        %v936 = vmul.f32 %v872, 0.7978846
        %v937 = vmul.f32 %v873, 0.7978846
        %v938 = vmul.f32 %v874, 0.7978846
        %v939 = vmul.f32 %v875, 0.7978846
        %v940 = vmul.f32 %v876, 0.7978846
        %v941 = vmul.f32 %v877, 0.7978846
        %v942 = vmul.f32 %v878, 0.7978846
        %v943 = vtanh.pop %v879
        %v944 = vtanh.pop %v880
        %v945 = vtanh.pop %v881
        %v946 = vtanh.pop %v882
        %v947 = vtanh.pop %v883
        %v948 = vtanh.pop %v884
        %v949 = vtanh.pop %v885
        %v950 = vtanh.pop %v886
        %v951 = vtanh.pop %v887
        %v952 = vtanh.pop %v888
        %v953 = vtanh.pop %v889
        %v954 = vtanh.pop %v890
        %v955 = vtanh.pop %v891
        %v956 = vtanh.pop %v892
        %v957 = vtanh.pop %v893
        %v958 = vtanh.pop %v894
        %v959 = vtanh.pop %v895
        %v960 = vtanh.pop %v896
        %v961 = vtanh.pop %v897
        %v962 = vtanh.pop %v898
        %v963 = vtanh.pop %v899
        %v964 = vtanh.pop %v900
        %v965 = vtanh.pop %v901
        %v966 = vtanh.pop %v902
        %v967 = vtanh.pop %v903
        %v968 = vtanh.pop %v904
        %v969 = vtanh.pop %v905
        %v970 = vtanh.pop %v906
        %v971 = vtanh.pop %v907
        %v972 = vtanh.pop %v908
        %v973 = vtanh.pop %v909
        %v974 = vtanh.pop %v910
        %v975 = vtanh.pop %v911
        %v976 = vtanh.pop %v912
        %v977 = vtanh.pop %v913
        %v978 = vtanh.pop %v914
        %v979 = vtanh.pop %v915
        %v980 = vtanh.pop %v916
        %v981 = vtanh.pop %v917
        %v982 = vtanh.pop %v918
        %v983 = vtanh.pop %v919
        %v984 = vtanh.pop %v920
        %v985 = vtanh.pop %v921
        %v986 = vtanh.pop %v922
        %v987 = vtanh.pop %v923
        %v988 = vtanh.pop %v924
        %v989 = vtanh.pop %v925
        %v990 = vtanh.pop %v926
        %v991 = vtanh.pop %v927
        %v992 = vtanh.pop %v928
        %v993 = vtanh.pop %v929
        %v994 = vtanh.pop %v930
        %v995 = vtanh.pop %v931
        %v996 = vtanh.pop %v932
        %v997 = vtanh.pop %v933
        %v998 = vtanh.pop %v934
        %v999 = vtanh.pop %v935
        %v1000 = vtanh.pop %v936
        %v1001 = vtanh.pop %v937
        %v1002 = vtanh.pop %v938
        %v1003 = vtanh.pop %v939
        %v1004 = vtanh.pop %v940
        %v1005 = vtanh.pop %v941
        %v1006 = vtanh.pop %v942
        %v1007 = vadd.f32 %v943, 1.0
        %v1008 = vadd.f32 %v944, 1.0
        %v1009 = vadd.f32 %v945, 1.0
        %v1010 = vadd.f32 %v946, 1.0
        %v1011 = vadd.f32 %v947, 1.0
        %v1012 = vadd.f32 %v948, 1.0
        %v1013 = vadd.f32 %v949, 1.0
        %v1014 = vadd.f32 %v950, 1.0
        %v1015 = vadd.f32 %v951, 1.0
        %v1016 = vadd.f32 %v952, 1.0
        %v1017 = vadd.f32 %v953, 1.0
        %v1018 = vadd.f32 %v954, 1.0
        %v1019 = vadd.f32 %v955, 1.0
        %v1020 = vadd.f32 %v956, 1.0
        %v1021 = vadd.f32 %v957, 1.0
        %v1022 = vadd.f32 %v958, 1.0
        %v1023 = vadd.f32 %v959, 1.0
        %v1024 = vadd.f32 %v960, 1.0
        %v1025 = vadd.f32 %v961, 1.0
        %v1026 = vadd.f32 %v962, 1.0
        %v1027 = vadd.f32 %v963, 1.0
        %v1028 = vadd.f32 %v964, 1.0
        %v1029 = vadd.f32 %v965, 1.0
        %v1030 = vadd.f32 %v966, 1.0
        %v1031 = vadd.f32 %v967, 1.0
        %v1032 = vadd.f32 %v968, 1.0
        %v1033 = vadd.f32 %v969, 1.0
        %v1034 = vadd.f32 %v970, 1.0
        %v1035 = vadd.f32 %v971, 1.0
        %v1036 = vadd.f32 %v972, 1.0
        %v1037 = vadd.f32 %v973, 1.0
        %v1038 = vadd.f32 %v974, 1.0
        %v1039 = vadd.f32 %v975, 1.0
        %v1040 = vadd.f32 %v976, 1.0
        %v1041 = vadd.f32 %v977, 1.0
        %v1042 = vadd.f32 %v978, 1.0
        %v1043 = vadd.f32 %v979, 1.0
        %v1044 = vadd.f32 %v980, 1.0
        %v1045 = vadd.f32 %v981, 1.0
        %v1046 = vadd.f32 %v982, 1.0
        %v1047 = vadd.f32 %v983, 1.0
        %v1048 = vadd.f32 %v984, 1.0
        %v1049 = vadd.f32 %v985, 1.0
        %v1050 = vadd.f32 %v986, 1.0
        %v1051 = vadd.f32 %v987, 1.0
        %v1052 = vadd.f32 %v988, 1.0
        %v1053 = vadd.f32 %v989, 1.0
        %v1054 = vadd.f32 %v990, 1.0
        %v1055 = vadd.f32 %v991, 1.0
        %v1056 = vadd.f32 %v992, 1.0
        %v1057 = vadd.f32 %v993, 1.0
        %v1058 = vadd.f32 %v994, 1.0
        %v1059 = vadd.f32 %v995, 1.0
        %v1060 = vadd.f32 %v996, 1.0
        %v1061 = vadd.f32 %v997, 1.0
        %v1062 = vadd.f32 %v998, 1.0
        %v1063 = vadd.f32 %v999, 1.0
        %v1064 = vadd.f32 %v1000, 1.0
        %v1065 = vadd.f32 %v1001, 1.0
        %v1066 = vadd.f32 %v1002, 1.0
        %v1067 = vadd.f32 %v1003, 1.0
        %v1068 = vadd.f32 %v1004, 1.0
        %v1069 = vadd.f32 %v1005, 1.0
        %v1070 = vadd.f32 %v1006, 1.0
        %v1071 = vmul.f32 %v1007, 0.5
        %v1072 = vmul.f32 %v1008, 0.5
        %v1073 = vmul.f32 %v1009, 0.5
        %v1074 = vmul.f32 %v1010, 0.5
        %v1075 = vmul.f32 %v1011, 0.5
        %v1076 = vmul.f32 %v1012, 0.5
        %v1077 = vmul.f32 %v1013, 0.5
        %v1078 = vmul.f32 %v1014, 0.5
        %v1079 = vmul.f32 %v1015, 0.5
        %v1080 = vmul.f32 %v1016, 0.5
        %v1081 = vmul.f32 %v1017, 0.5
        %v1082 = vmul.f32 %v1018, 0.5
        %v1083 = vmul.f32 %v1019, 0.5
        %v1084 = vmul.f32 %v1020, 0.5
        %v1085 = vmul.f32 %v1021, 0.5
        %v1086 = vmul.f32 %v1022, 0.5
        %v1087 = vmul.f32 %v1023, 0.5
        %v1088 = vmul.f32 %v1024, 0.5
        %v1089 = vmul.f32 %v1025, 0.5
        %v1090 = vmul.f32 %v1026, 0.5
        %v1091 = vmul.f32 %v1027, 0.5
        %v1092 = vmul.f32 %v1028, 0.5
        %v1093 = vmul.f32 %v1029, 0.5
        %v1094 = vmul.f32 %v1030, 0.5
        %v1095 = vmul.f32 %v1031, 0.5
        %v1096 = vmul.f32 %v1032, 0.5
        %v1097 = vmul.f32 %v1033, 0.5
        %v1098 = vmul.f32 %v1034, 0.5
        %v1099 = vmul.f32 %v1035, 0.5
        %v1100 = vmul.f32 %v1036, 0.5
        %v1101 = vmul.f32 %v1037, 0.5
        %v1102 = vmul.f32 %v1038, 0.5
        %v1103 = vmul.f32 %v1039, 0.5
        %v1104 = vmul.f32 %v1040, 0.5
        %v1105 = vmul.f32 %v1041, 0.5
        %v1106 = vmul.f32 %v1042, 0.5
        %v1107 = vmul.f32 %v1043, 0.5
        %v1108 = vmul.f32 %v1044, 0.5
        %v1109 = vmul.f32 %v1045, 0.5
        %v1110 = vmul.f32 %v1046, 0.5
        %v1111 = vmul.f32 %v1047, 0.5
        %v1112 = vmul.f32 %v1048, 0.5
        %v1113 = vmul.f32 %v1049, 0.5
        %v1114 = vmul.f32 %v1050, 0.5
        %v1115 = vmul.f32 %v1051, 0.5
        %v1116 = vmul.f32 %v1052, 0.5
        %v1117 = vmul.f32 %v1053, 0.5
        %v1118 = vmul.f32 %v1054, 0.5
        %v1119 = vmul.f32 %v1055, 0.5
        %v1120 = vmul.f32 %v1056, 0.5
        %v1121 = vmul.f32 %v1057, 0.5
        %v1122 = vmul.f32 %v1058, 0.5
        %v1123 = vmul.f32 %v1059, 0.5
        %v1124 = vmul.f32 %v1060, 0.5
        %v1125 = vmul.f32 %v1061, 0.5
        %v1126 = vmul.f32 %v1062, 0.5
        %v1127 = vmul.f32 %v1063, 0.5
        %v1128 = vmul.f32 %v1064, 0.5
        %v1129 = vmul.f32 %v1065, 0.5
        %v1130 = vmul.f32 %v1066, 0.5
        %v1131 = vmul.f32 %v1067, 0.5
        %v1132 = vmul.f32 %v1068, 0.5
        %v1133 = vmul.f32 %v1069, 0.5
        %v1134 = vmul.f32 %v1070, 0.5
        %v1135 = vmul.f32 %v455, %v1071
        %v1136 = vmul.f32 %v544, %v1072
        %v1137 = vmul.f32 %v457, %v1073
        %v1138 = vmul.f32 %v546, %v1074
        %v1139 = vmul.f32 %v460, %v1075
        %v1140 = vmul.f32 %v549, %v1076
        %v1141 = vmul.f32 %v462, %v1077
        %v1142 = vmul.f32 %v551, %v1078
        %v1143 = vmul.f32 %v465, %v1079
        %v1144 = vmul.f32 %v554, %v1080
        %v1145 = vmul.f32 %v467, %v1081
        %v1146 = vmul.f32 %v556, %v1082
        %v1147 = vmul.f32 %v470, %v1083
        %v1148 = vmul.f32 %v559, %v1084
        %v1149 = vmul.f32 %v472, %v1085
        %v1150 = vmul.f32 %v561, %v1086
        %v1151 = vmul.f32 %v475, %v1087
        %v1152 = vmul.f32 %v564, %v1088
        %v1153 = vmul.f32 %v477, %v1089
        %v1154 = vmul.f32 %v566, %v1090
        %v1155 = vmul.f32 %v480, %v1091
        %v1156 = vmul.f32 %v569, %v1092
        %v1157 = vmul.f32 %v482, %v1093
        %v1158 = vmul.f32 %v571, %v1094
        %v1159 = vmul.f32 %v485, %v1095
        %v1160 = vmul.f32 %v574, %v1096
        %v1161 = vmul.f32 %v487, %v1097
        %v1162 = vmul.f32 %v576, %v1098
        %v1163 = vmul.f32 %v490, %v1099
        %v1164 = vmul.f32 %v579, %v1100
        %v1165 = vmul.f32 %v492, %v1101
        %v1166 = vmul.f32 %v581, %v1102
        %v1167 = vmul.f32 %v495, %v1103
        %v1168 = vmul.f32 %v584, %v1104
        %v1169 = vmul.f32 %v497, %v1105
        %v1170 = vmul.f32 %v586, %v1106
        %v1171 = vmul.f32 %v500, %v1107
        %v1172 = vmul.f32 %v589, %v1108
        %v1173 = vmul.f32 %v502, %v1109
        %v1174 = vmul.f32 %v591, %v1110
        %v1175 = vmul.f32 %v505, %v1111
        %v1176 = vmul.f32 %v594, %v1112
        %v1177 = vmul.f32 %v507, %v1113
        %v1178 = vmul.f32 %v596, %v1114
        %v1179 = vmul.f32 %v510, %v1115
        %v1180 = vmul.f32 %v599, %v1116
        %v1181 = vmul.f32 %v512, %v1117
        %v1182 = vmul.f32 %v601, %v1118
        %v1183 = vmul.f32 %v515, %v1119
        %v1184 = vmul.f32 %v604, %v1120
        %v1185 = vmul.f32 %v517, %v1121
        %v1186 = vmul.f32 %v606, %v1122
        %v1187 = vmul.f32 %v520, %v1123
        %v1188 = vmul.f32 %v609, %v1124
        %v1189 = vmul.f32 %v522, %v1125
        %v1190 = vmul.f32 %v611, %v1126
        %v1191 = vmul.f32 %v525, %v1127
        %v1192 = vmul.f32 %v614, %v1128
        %v1193 = vmul.f32 %v527, %v1129
        %v1194 = vmul.f32 %v616, %v1130
        %v1195 = vmul.f32 %v530, %v1131
        %v1196 = vmul.f32 %v619, %v1132
        %v1197 = vmul.f32 %v532, %v1133
        %v1198 = vmul.f32 %v621, %v1134
        %v1199 = vpack.c.bf16 %v1137, %v1135
        %v1200 = vpack.c.bf16 %v1138, %v1136
        %v1201 = vpack.c.bf16 %v1141, %v1139
        %v1202 = vpack.c.bf16 %v1142, %v1140
        %v1203 = vpack.c.bf16 %v1145, %v1143
        %v1204 = vpack.c.bf16 %v1146, %v1144
        %v1205 = vpack.c.bf16 %v1149, %v1147
        %v1206 = vpack.c.bf16 %v1150, %v1148
        %v1207 = vpack.c.bf16 %v1153, %v1151
        %v1208 = vpack.c.bf16 %v1154, %v1152
        %v1209 = vpack.c.bf16 %v1157, %v1155
        %v1210 = vpack.c.bf16 %v1158, %v1156
        %v1211 = vpack.c.bf16 %v1161, %v1159
        %v1212 = vpack.c.bf16 %v1162, %v1160
        %v1213 = vpack.c.bf16 %v1165, %v1163
        %v1214 = vpack.c.bf16 %v1166, %v1164
        %v1215 = vpack.c.bf16 %v1169, %v1167
        %v1216 = vpack.c.bf16 %v1170, %v1168
        %v1217 = vpack.c.bf16 %v1173, %v1171
        %v1218 = vpack.c.bf16 %v1174, %v1172
        %v1219 = vpack.c.bf16 %v1177, %v1175
        %v1220 = vpack.c.bf16 %v1178, %v1176
        %v1221 = vpack.c.bf16 %v1181, %v1179
        %v1222 = vpack.c.bf16 %v1182, %v1180
        %v1223 = vpack.c.bf16 %v1185, %v1183
        %v1224 = vpack.c.bf16 %v1186, %v1184
        %v1225 = vpack.c.bf16 %v1189, %v1187
        %v1226 = vpack.c.bf16 %v1190, %v1188
        %v1227 = vpack.c.bf16 %v1193, %v1191
        %v1228 = vpack.c.bf16 %v1194, %v1192
        %v1229 = vpack.c.bf16 %v1197, %v1195
        %v1230 = vpack.c.bf16 %v1198, %v1196
        %v1231 = vld [vmem:[#allocation8] sm:$0xf]
        %v1232 = vld [vmem:[#allocation8 + $0x4] sm:$0xf]
        %v1233 = vld [vmem:[#allocation8 + $0x8] sm:$0xf]
        %v1234 = vld [vmem:[#allocation8 + $0xc] sm:$0xf]
        %v1235 = vld [vmem:[#allocation8 + $0x10] sm:$0xf]
        %v1236 = vld [vmem:[#allocation8 + $0x14] sm:$0xf]
        %v1237 = vld [vmem:[#allocation8 + $0x18] sm:$0xf]
        %v1238 = vld [vmem:[#allocation8 + $0x1c] sm:$0xf]
        %v1239 = vld [vmem:[#allocation8 + $0x20] sm:$0xf]
        %v1240 = vld [vmem:[#allocation8 + $0x24] sm:$0xf]
        %v1241 = vld [vmem:[#allocation8 + $0x28] sm:$0xf]
        %v1242 = vld [vmem:[#allocation8 + $0x2c] sm:$0xf]
        %v1243 = vld [vmem:[#allocation8 + $0x30] sm:$0xf]
        %v1244 = vld [vmem:[#allocation8 + $0x34] sm:$0xf]
        %v1245 = vld [vmem:[#allocation8 + $0x38] sm:$0xf]
        %v1246 = vld [vmem:[#allocation8 + $0x3c] sm:$0xf]
        %v1247 = vld [vmem:[#allocation8 + $0x40] sm:$0xf]
        %v1248 = vld [vmem:[#allocation8 + $0x44] sm:$0xf]
        %v1249 = vld [vmem:[#allocation8 + $0x48] sm:$0xf]
        %v1250 = vld [vmem:[#allocation8 + $0x4c] sm:$0xf]
        %v1251 = vld [vmem:[#allocation8 + $0x50] sm:$0xf]
        %v1252 = vld [vmem:[#allocation8 + $0x54] sm:$0xf]
        %v1253 = vld [vmem:[#allocation8 + $0x58] sm:$0xf]
        %v1254 = vld [vmem:[#allocation8 + $0x5c] sm:$0xf]
        %v1255 = vld [vmem:[#allocation8 + $0x60] sm:$0xf]
        %v1256 = vld [vmem:[#allocation8 + $0x64] sm:$0xf]
        %v1257 = vld [vmem:[#allocation8 + $0x68] sm:$0xf]
        %v1258 = vld [vmem:[#allocation8 + $0x6c] sm:$0xf]
        %v1259 = vld [vmem:[#allocation8 + $0x70] sm:$0xf]
        %v1260 = vld [vmem:[#allocation8 + $0x74] sm:$0xf]
        %v1261 = vld [vmem:[#allocation8 + $0x78] sm:$0xf]
        %v1262 = vld [vmem:[#allocation8 + $0x7c] sm:$0xf]
        %v1263 = vld [vmem:[%s4] sm:$0x1]
        %v1265 = vperm.slane %v1263, 0
        %v1299 = vunpack.c.l.b16 %v1231
        %v1300 = vunpack.c.l.b16 %v1232
        %v1301 = vunpack.c.l.b16 %v1233
        %v1302 = vunpack.c.l.b16 %v1234
        %v1303 = vunpack.c.l.b16 %v1235
        %v1304 = vunpack.c.l.b16 %v1236
        %v1305 = vunpack.c.l.b16 %v1237
        %v1306 = vunpack.c.l.b16 %v1238
        %v1307 = vunpack.c.l.b16 %v1239
        %v1308 = vunpack.c.l.b16 %v1240
        %v1309 = vunpack.c.l.b16 %v1241
        %v1310 = vunpack.c.l.b16 %v1242
        %v1311 = vunpack.c.l.b16 %v1243
        %v1312 = vunpack.c.l.b16 %v1244
        %v1313 = vunpack.c.l.b16 %v1245
        %v1314 = vunpack.c.l.b16 %v1246
        %v1315 = vunpack.c.l.b16 %v1247
        %v1316 = vunpack.c.l.b16 %v1248
        %v1317 = vunpack.c.l.b16 %v1249
        %v1318 = vunpack.c.l.b16 %v1250
        %v1319 = vunpack.c.l.b16 %v1251
        %v1320 = vunpack.c.l.b16 %v1252
        %v1321 = vunpack.c.l.b16 %v1253
        %v1322 = vunpack.c.l.b16 %v1254
        %v1323 = vunpack.c.l.b16 %v1255
        %v1324 = vunpack.c.l.b16 %v1256
        %v1325 = vunpack.c.l.b16 %v1257
        %v1326 = vunpack.c.l.b16 %v1258
        %v1327 = vunpack.c.l.b16 %v1259
        %v1328 = vunpack.c.l.b16 %v1260
        %v1329 = vunpack.c.l.b16 %v1261
        %v1330 = vunpack.c.l.b16 %v1262
        %v1331 = vpack.c.b16 %v1300, %v1299
        %v1332 = vpack.c.b16 %v1302, %v1301
        %v1333 = vpack.c.b16 %v1304, %v1303
        %v1334 = vpack.c.b16 %v1306, %v1305
        %v1335 = vpack.c.b16 %v1308, %v1307
        %v1336 = vpack.c.b16 %v1310, %v1309
        %v1337 = vpack.c.b16 %v1312, %v1311
        %v1338 = vpack.c.b16 %v1314, %v1313
        %v1339 = vpack.c.b16 %v1316, %v1315
        %v1340 = vpack.c.b16 %v1318, %v1317
        %v1341 = vpack.c.b16 %v1320, %v1319
        %v1342 = vpack.c.b16 %v1322, %v1321
        %v1343 = vpack.c.b16 %v1324, %v1323
        %v1344 = vpack.c.b16 %v1326, %v1325
        %v1345 = vpack.c.b16 %v1328, %v1327
        %v1346 = vpack.c.b16 %v1330, %v1329
        %1363 = vmatpush.bf16.msra.mxu0 %v1338
        %1364 = vmatpush.bf16.msra.mxu0 %v1337
        %1365 = vmatpush.bf16.msra.mxu0 %v1336
        %1366 = vmatpush.bf16.msra.mxu0 %v1335
        %1367 = vmatpush.bf16.msra.mxu0 %v1334
        %1368 = vmatpush.bf16.msra.mxu0 %v1333
        %1369 = vmatpush.bf16.msra.mxu0 %v1332
        %1370 = vmatpush.bf16.msra.mxu0 %v1331
        %1371 = vmatmul.bf16.gmra.mxu0 %v1199
        %v1372 = vpop.f32.mrf.mxu0
        %v1373 = vadd.f32 %v1265, %v1372
        %v1374 = vpop.f32.mrf.mxu0
        %v1375 = vadd.f32 %v1265, %v1374
        %1376 = vmatmul.bf16.gmra.mxu0 %v1201
        %v1377 = vpop.f32.mrf.mxu0
        %v1378 = vadd.f32 %v1265, %v1377
        %v1379 = vpop.f32.mrf.mxu0
        %v1380 = vadd.f32 %v1265, %v1379
        %1381 = vmatmul.bf16.gmra.mxu0 %v1203
        %v1382 = vpop.f32.mrf.mxu0
        %v1383 = vadd.f32 %v1265, %v1382
        %v1384 = vpop.f32.mrf.mxu0
        %v1385 = vadd.f32 %v1265, %v1384
        %1386 = vmatmul.bf16.gmra.mxu0 %v1205
        %v1387 = vpop.f32.mrf.mxu0
        %v1388 = vadd.f32 %v1265, %v1387
        %v1389 = vpop.f32.mrf.mxu0
        %v1390 = vadd.f32 %v1265, %v1389
        %1391 = vmatmul.bf16.gmra.mxu0 %v1207
        %v1392 = vpop.f32.mrf.mxu0
        %v1393 = vadd.f32 %v1265, %v1392
        %v1394 = vpop.f32.mrf.mxu0
        %v1395 = vadd.f32 %v1265, %v1394
        %1396 = vmatmul.bf16.gmra.mxu0 %v1209
        %v1397 = vpop.f32.mrf.mxu0
        %v1398 = vadd.f32 %v1265, %v1397
        %v1399 = vpop.f32.mrf.mxu0
        %v1400 = vadd.f32 %v1265, %v1399
        %1401 = vmatmul.bf16.gmra.mxu0 %v1211
        %v1402 = vpop.f32.mrf.mxu0
        %v1403 = vadd.f32 %v1265, %v1402
        %v1404 = vpop.f32.mrf.mxu0
        %v1405 = vadd.f32 %v1265, %v1404
        %1406 = vmatmul.bf16.gmra.mxu0 %v1213
        %v1407 = vpop.f32.mrf.mxu0
        %v1408 = vadd.f32 %v1265, %v1407
        %v1409 = vpop.f32.mrf.mxu0
        %v1410 = vadd.f32 %v1265, %v1409
        %1411 = vmatmul.bf16.gmra.mxu0 %v1215
        %v1412 = vpop.f32.mrf.mxu0
        %v1413 = vadd.f32 %v1265, %v1412
        %v1414 = vpop.f32.mrf.mxu0
        %v1415 = vadd.f32 %v1265, %v1414
        %1416 = vmatmul.bf16.gmra.mxu0 %v1217
        %v1417 = vpop.f32.mrf.mxu0
        %v1418 = vadd.f32 %v1265, %v1417
        %v1419 = vpop.f32.mrf.mxu0
        %v1420 = vadd.f32 %v1265, %v1419
        %1421 = vmatmul.bf16.gmra.mxu0 %v1219
        %v1422 = vpop.f32.mrf.mxu0
        %v1423 = vadd.f32 %v1265, %v1422
        %v1424 = vpop.f32.mrf.mxu0
        %v1425 = vadd.f32 %v1265, %v1424
        %1426 = vmatmul.bf16.gmra.mxu0 %v1221
        %v1427 = vpop.f32.mrf.mxu0
        %v1428 = vadd.f32 %v1265, %v1427
        %v1429 = vpop.f32.mrf.mxu0
        %v1430 = vadd.f32 %v1265, %v1429
        %1431 = vmatmul.bf16.gmra.mxu0 %v1223
        %v1432 = vpop.f32.mrf.mxu0
        %v1433 = vadd.f32 %v1265, %v1432
        %v1434 = vpop.f32.mrf.mxu0
        %v1435 = vadd.f32 %v1265, %v1434
        %1436 = vmatmul.bf16.gmra.mxu0 %v1225
        %v1437 = vpop.f32.mrf.mxu0
        %v1438 = vadd.f32 %v1265, %v1437
        %v1439 = vpop.f32.mrf.mxu0
        %v1440 = vadd.f32 %v1265, %v1439
        %1441 = vmatmul.bf16.gmra.mxu0 %v1227
        %v1442 = vpop.f32.mrf.mxu0
        %v1443 = vadd.f32 %v1265, %v1442
        %v1444 = vpop.f32.mrf.mxu0
        %v1445 = vadd.f32 %v1265, %v1444
        %1446 = vmatmul.bf16.gmra.mxu0 %v1229
        %v1447 = vpop.f32.mrf.mxu0
        %v1448 = vadd.f32 %v1265, %v1447
        %v1449 = vpop.f32.mrf.mxu0
        %v1450 = vadd.f32 %v1265, %v1449
        %1451 = vdwg.mxu0
        %1452 = vmatpush.bf16.msra.mxu0 %v1346
        %1453 = vmatpush.bf16.msra.mxu0 %v1345
        %1454 = vmatpush.bf16.msra.mxu0 %v1344
        %1455 = vmatpush.bf16.msra.mxu0 %v1343
        %1456 = vmatpush.bf16.msra.mxu0 %v1342
        %1457 = vmatpush.bf16.msra.mxu0 %v1341
        %1458 = vmatpush.bf16.msra.mxu0 %v1340
        %1459 = vmatpush.bf16.msra.mxu0 %v1339
        %1460 = vmatmul.bf16.gmra.mxu0 %v1200
        %v1461 = vpop.f32.mrf.mxu0
        %v1462 = vadd.f32 %v1373, %v1461
        %v1463 = vpop.f32.mrf.mxu0
        %v1464 = vadd.f32 %v1375, %v1463
        %1465 = vmatmul.bf16.gmra.mxu0 %v1202
        %v1466 = vpop.f32.mrf.mxu0
        %v1467 = vadd.f32 %v1378, %v1466
        %v1468 = vpop.f32.mrf.mxu0
        %v1469 = vadd.f32 %v1380, %v1468
        %1470 = vmatmul.bf16.gmra.mxu0 %v1204
        %v1471 = vpop.f32.mrf.mxu0
        %v1472 = vadd.f32 %v1383, %v1471
        %v1473 = vpop.f32.mrf.mxu0
        %v1474 = vadd.f32 %v1385, %v1473
        %1475 = vmatmul.bf16.gmra.mxu0 %v1206
        %v1476 = vpop.f32.mrf.mxu0
        %v1477 = vadd.f32 %v1388, %v1476
        %v1478 = vpop.f32.mrf.mxu0
        %v1479 = vadd.f32 %v1390, %v1478
        %1480 = vmatmul.bf16.gmra.mxu0 %v1208
        %v1481 = vpop.f32.mrf.mxu0
        %v1482 = vadd.f32 %v1393, %v1481
        %v1483 = vpop.f32.mrf.mxu0
        %v1484 = vadd.f32 %v1395, %v1483
        %1485 = vmatmul.bf16.gmra.mxu0 %v1210
        %v1486 = vpop.f32.mrf.mxu0
        %v1487 = vadd.f32 %v1398, %v1486
        %v1488 = vpop.f32.mrf.mxu0
        %v1489 = vadd.f32 %v1400, %v1488
        %1490 = vmatmul.bf16.gmra.mxu0 %v1212
        %v1491 = vpop.f32.mrf.mxu0
        %v1492 = vadd.f32 %v1403, %v1491
        %v1493 = vpop.f32.mrf.mxu0
        %v1494 = vadd.f32 %v1405, %v1493
        %1495 = vmatmul.bf16.gmra.mxu0 %v1214
        %v1496 = vpop.f32.mrf.mxu0
        %v1497 = vadd.f32 %v1408, %v1496
        %v1498 = vpop.f32.mrf.mxu0
        %v1499 = vadd.f32 %v1410, %v1498
        %1500 = vmatmul.bf16.gmra.mxu0 %v1216
        %v1501 = vpop.f32.mrf.mxu0
        %v1502 = vadd.f32 %v1413, %v1501
        %v1503 = vpop.f32.mrf.mxu0
        %v1504 = vadd.f32 %v1415, %v1503
        %1505 = vmatmul.bf16.gmra.mxu0 %v1218
        %v1506 = vpop.f32.mrf.mxu0
        %v1507 = vadd.f32 %v1418, %v1506
        %v1508 = vpop.f32.mrf.mxu0
        %v1509 = vadd.f32 %v1420, %v1508
        %1510 = vmatmul.bf16.gmra.mxu0 %v1220
        %v1511 = vpop.f32.mrf.mxu0
        %v1512 = vadd.f32 %v1423, %v1511
        %v1513 = vpop.f32.mrf.mxu0
        %v1514 = vadd.f32 %v1425, %v1513
        %1515 = vmatmul.bf16.gmra.mxu0 %v1222
        %v1516 = vpop.f32.mrf.mxu0
        %v1517 = vadd.f32 %v1428, %v1516
        %v1518 = vpop.f32.mrf.mxu0
        %v1519 = vadd.f32 %v1430, %v1518
        %1520 = vmatmul.bf16.gmra.mxu0 %v1224
        %v1521 = vpop.f32.mrf.mxu0
        %v1522 = vadd.f32 %v1433, %v1521
        %v1523 = vpop.f32.mrf.mxu0
        %v1524 = vadd.f32 %v1435, %v1523
        %1525 = vmatmul.bf16.gmra.mxu0 %v1226
        %v1526 = vpop.f32.mrf.mxu0
        %v1527 = vadd.f32 %v1438, %v1526
        %v1528 = vpop.f32.mrf.mxu0
        %v1529 = vadd.f32 %v1440, %v1528
        %1530 = vmatmul.bf16.gmra.mxu0 %v1228
        %v1531 = vpop.f32.mrf.mxu0
        %v1532 = vadd.f32 %v1443, %v1531
        %v1533 = vpop.f32.mrf.mxu0
        %v1534 = vadd.f32 %v1445, %v1533
        %1535 = vmatmul.bf16.gmra.mxu0 %v1230
        %v1536 = vpop.f32.mrf.mxu0
        %v1537 = vadd.f32 %v1448, %v1536
        %v1538 = vpop.f32.mrf.mxu0
        %v1539 = vadd.f32 %v1450, %v1538
        %1540 = vdwg.mxu0
        %1541 = vst [vmem:[%s292] sm:$0xff] %v1462
        %1542 = vst [vmem:[%s292 + $0x8] sm:$0xff] %v1464
        %1543 = vst [vmem:[%s292 + $0x10] sm:$0xff] %v1467
        %1544 = vst [vmem:[%s292 + $0x18] sm:$0xff] %v1469
        %1545 = vst [vmem:[%s292 + $0x20] sm:$0xff] %v1472
        %1546 = vst [vmem:[%s292 + $0x28] sm:$0xff] %v1474
        %1547 = vst [vmem:[%s292 + $0x30] sm:$0xff] %v1477
        %1548 = vst [vmem:[%s292 + $0x38] sm:$0xff] %v1479
        %1549 = vst [vmem:[%s292 + $0x40] sm:$0xff] %v1482
        %1550 = vst [vmem:[%s292 + $0x48] sm:$0xff] %v1484
        %1551 = vst [vmem:[%s292 + $0x50] sm:$0xff] %v1487
        %1552 = vst [vmem:[%s292 + $0x58] sm:$0xff] %v1489
        %1553 = vst [vmem:[%s292 + $0x60] sm:$0xff] %v1492
        %1554 = vst [vmem:[%s292 + $0x68] sm:$0xff] %v1494
        %1555 = vst [vmem:[%s292 + $0x70] sm:$0xff] %v1497
        %1556 = vst [vmem:[%s292 + $0x78] sm:$0xff] %v1499
        %1557 = vst [vmem:[%s292 + $0x80] sm:$0xff] %v1502
        %1558 = vst [vmem:[%s292 + $0x88] sm:$0xff] %v1504
        %1559 = vst [vmem:[%s292 + $0x90] sm:$0xff] %v1507
        %1560 = vst [vmem:[%s292 + $0x98] sm:$0xff] %v1509
        %1561 = vst [vmem:[%s292 + $0xa0] sm:$0xff] %v1512
        %1562 = vst [vmem:[%s292 + $0xa8] sm:$0xff] %v1514
        %1563 = vst [vmem:[%s292 + $0xb0] sm:$0xff] %v1517
        %1564 = vst [vmem:[%s292 + $0xb8] sm:$0xff] %v1519
        %1565 = vst [vmem:[%s292 + $0xc0] sm:$0xff] %v1522
        %1566 = vst [vmem:[%s292 + $0xc8] sm:$0xff] %v1524
        %1567 = vst [vmem:[%s292 + $0xd0] sm:$0xff] %v1527
        %1568 = vst [vmem:[%s292 + $0xd8] sm:$0xff] %v1529
        %1569 = vst [vmem:[%s292 + $0xe0] sm:$0xff] %v1532
        %1570 = vst [vmem:[%s292 + $0xe8] sm:$0xff] %v1534
        %1571 = vst [vmem:[%s292 + $0xf0] sm:$0xff] %v1537
        %1572 = vst [vmem:[%s292 + $0xf8] sm:$0xff] %v1539
        %s1573 = sand.u32 %s142, 1
        %s1574 = scalar_lea.sflag [#allocation4], %s1573
        %s1575 = sand.u32 %s142, 1
        %s1576 = smul.addr %s1575, 256
        %s1577 = scalar_lea.vmem [#allocation10], %s1576
        // Predicated region
        $region57: #{tpu_custom_call.1} parent=39 // pred_check
          %p1578 = pneg %p152
        $region58: #{tpu_custom_call.1} parent=39 // pred_check_branch
          %1580 = sbr.rel (%p1578) target = $region60
        $region59: #{tpu_custom_call.1} parent=39 // pred_region
          %s1581 = smul.u32 32, %s24
          %1583 = vsyncadd %s1574, 0
          %s1584 = smul.addr %s1581, 8
          %s1585 = scalar_lea.hbm %s5, %s1584
          %s1586 = sshll.u32 %s1577, 4
          %s1587 = int_to_ptr.vmem [resolvable:$true] %s1586
          %s1588 = sshll.u32 %s1585, 4
          %s1589 = int_to_ptr.hbm [resolvable:$true] %s1588
          %1594 = dma.vmem_to_hbm [thread:$0]  %s1587, 4096, %s1589, %s1574, 128, 128, 8
        $region60: #{tpu_custom_call.1} parent=39 // pred_fallthru
          _
      $region40: #{tpu_custom_call.1} parent=5 // pred_fallthru
        _
      %p1595 = scmp.le.s32.totalorder 2, %s19
      // Predicated region
      $region61: #{tpu_custom_call.1} parent=5 // pred_check
        %p1596 = pneg %p1595
      $region62: #{tpu_custom_call.1} parent=5 // pred_check_branch
        %1598 = sbr.rel (%p1596) target = $region64
      $region63: #{tpu_custom_call.1} parent=5 // pred_region
        %s1599 = ssub.s32 %s19, 2
        // Predicated region
        $region65: #{tpu_custom_call.1} parent=63 // pred_check
          %p1600 = pneg %p158
        $region66: #{tpu_custom_call.1} parent=63 // pred_check_branch
          %1602 = sbr.rel (%p1600) target = $region68
        $region67: #{tpu_custom_call.1} parent=63 // pred_region
          %s1603 = sand.u32 %s143, 1
          %s1604 = scalar_lea.sflag [#allocation4], %s1603
          %s1605 = sand.u32 %s143, 1
          %s1606 = smul.addr %s1605, 256
          %s1607 = scalar_lea.vmem [#allocation10], %s1606
          %1609 = dma.done %s1604, 4096
        $region68: #{tpu_custom_call.1} parent=63 // pred_fallthru
          _
      $region64: #{tpu_custom_call.1} parent=5 // pred_fallthru
        _
    $region6: #{tpu_custom_call.1} parent=1 // loop_footer
      %s23 = sadd.s32 1, %s19
    $region7: #{tpu_custom_call.1} parent=1 // loop_footer_branch
      %18 = sbr.rel target = $region3
    $region8: #{tpu_custom_call.1} parent=1 // loop_exit
      _
    %1610 = vsyncpa [#allocation3], 1
    %s1611 = scalar_lea.sflag [#allocation3], 1
    %1612 = vsyncpa %s1611, 1
    %1613 = vsyncpa [#allocation6], 1
    %1614 = vsyncpa [#allocation9], 1
    %1615 = vsyncpa [#allocation4], 1
    %s1616 = scalar_lea.sflag [#allocation4], 1
    %1617 = vsyncpa %s1616, 1

</llo_original>
